<compile_context>
chip_gen: v7x
topology: tpu7x:2x2x1
jax: 0.10.0
libtpu: 0.0.40
codegen_flags: <defaults>
</compile_context>

<pallas_src>
import functools
import math

import jax
import jax.numpy as jnp
import numpy as np
from jax.experimental import pallas as pl
from jax.experimental.pallas import tpu as pltpu


# ----------------------------------------------------------------- helpers

def _layer_norm(x, w, b, eps=1e-5):
    mu = jnp.mean(x, axis=-1, keepdims=True)
    xc = x - mu
    var = jnp.mean(xc * xc, axis=-1, keepdims=True)
    return xc * jax.lax.rsqrt(var + eps) * w + b


def _new_gelu(x):
    c = math.sqrt(2.0 / math.pi)
    return 0.5 * x * (1.0 + jnp.tanh(c * (x + 0.044715 * x * x * x)))


def _round_up(v, m):
    return (v + m - 1) // m * m


def _vmem_capacity_bytes():
    """Per-generation VMEM capacity (v5e/v6e: 128 MiB, v7x: 64 MiB per TC)."""
    try:
        cap = getattr(pltpu.get_tpu_info(), "vmem_capacity_bytes", None)
        if cap:
            return int(cap)
    except Exception:
        pass
    return 64 * 2 ** 20            # conservative fallback = v7x per-core VMEM


def _pick_m_tile(batch, seq, layer_stream_bytes, per_row_bytes, vmem_budget,
                 target_rows=512):
    """Rows (= whole sequences) per M tile.

    Preference among candidates (whole sequences, 8-row aligned or the full
    array, fitting the VMEM budget):
      1. smallest tile >= target_rows that still leaves >= 2 M tiles
         (amortises weight streaming AND shards across both v7x TensorCores),
      2. smallest tile >= target_rows,
      3. largest tile with >= 2 M tiles,
      4. largest fitting tile.
    """
    total = batch * seq
    cands = []
    for s in range(batch, 0, -1):
        if batch % s:
            continue
        rows = s * seq
        if rows % 8 == 0 or rows == total:
            cands.append(rows)                       # descending
    fits = [r for r in cands
            if layer_stream_bytes + r * per_row_bytes <= vmem_budget]
    if not fits:
        fits = [cands[-1]]                           # smallest legal tile
    big_multi = [r for r in fits if r >= target_rows and total // r >= 2]
    if big_multi:
        return min(big_multi)
    big = [r for r in fits if r >= target_rows]
    if big:
        return min(big)
    multi = [r for r in fits if total // r >= 2]
    if multi:
        return max(multi)
    return max(fits)


# ----------------------------------------------------------------- kernels

def embed_kernel(x_ref, pos_ref, wte_w_ref, wte_b_ref, h0_ref):
    tok = jnp.dot(x_ref[...].astype(jnp.bfloat16), wte_w_ref[...],
                  preferred_element_type=jnp.float32)
    h0_ref[...] = tok + wte_b_ref[...] + pos_ref[...]      # dropout = identity


def layers_kernel(h0_ref, ln1_w_ref, ln1_b_ref, attn_w_ref, attn_b_ref,
                  proj_w_ref, proj_b_ref, ln2_w_ref, ln2_b_ref,
                  fc_w_ref, fc_b_ref, mproj_w_ref, mproj_b_ref,
                  hout_ref, h_ref, *, n_head, head_dim, seq_len):
    layer = pl.program_id(1)
    n_layer = pl.num_programs(1)
    TM, C = h_ref.shape
    T = seq_len
    nseq = TM // T
    bf16, f32 = jnp.bfloat16, jnp.float32

    @pl.when(layer == 0)
    def _init():
        h_ref[...] = h0_ref[...]

    x = h_ref[...]

    # ---- causal self-attention (fresh K/V cache, eval mode) ----
    xn = _layer_norm(x, ln1_w_ref[...], ln1_b_ref[...]).astype(bf16)
    qkv = jnp.dot(xn, attn_w_ref[...],
                  preferred_element_type=f32) + attn_b_ref[...]

    scale = 1.0 / math.sqrt(head_dim)
    # (nseq, T, T) causal mask built in-kernel from iota: no HBM mask tensor.
    row_id = jax.lax.broadcasted_iota(jnp.int32, (nseq, T, T), 1)
    col_id = jax.lax.broadcasted_iota(jnp.int32, (nseq, T, T), 2)
    causal = row_id >= col_id

    head_outs = []
    for h in range(n_head):                 # static unroll; n_head is small
        q_sl = slice(h * head_dim, (h + 1) * head_dim)
        k_sl = slice(C + h * head_dim, C + (h + 1) * head_dim)
        v_sl = slice(2 * C + h * head_dim, 2 * C + (h + 1) * head_dim)
        qh = qkv[:, q_sl].reshape(nseq, T, head_dim).astype(bf16)
        kh = qkv[:, k_sl].reshape(nseq, T, head_dim).astype(bf16)
        vh = qkv[:, v_sl].reshape(nseq, T, head_dim).astype(bf16)
        # Per-sequence batched scores: only T x T per sequence, not the
        # (TM, TM) block-diagonal waste -> far fewer MXU flops / exp() calls.
        att = jnp.einsum("bqd,bkd->bqk", qh, kh,
                         preferred_element_type=f32) * scale
        att = jnp.where(causal, att, -1e30)   # finite: no NaN on padded rows
        att = att - jnp.max(att, axis=-1, keepdims=True)
        p = jnp.exp(att)
        p = p * pl.reciprocal(jnp.sum(p, axis=-1, keepdims=True), approx=True)
        yh = jnp.einsum("bqk,bkd->bqd", p.astype(bf16), vh,
                        preferred_element_type=f32)
        head_outs.append(yh.reshape(TM, head_dim))
    # Single dense (TM, C) value for the output projection: no per-head
    # sub-128-lane masked stores.
    y = jnp.concatenate(head_outs, axis=-1).astype(bf16)
    # TODO(synk): for large block_size T, switch to flash-style K/V tiling
    # inside the per-sequence loop to bound vreg pressure.

    x = x + jnp.dot(y, proj_w_ref[...],
                    preferred_element_type=f32) + proj_b_ref[...]

    # ---- MLP ----
    xn2 = _layer_norm(x, ln2_w_ref[...], ln2_b_ref[...]).astype(bf16)
    hid = jnp.dot(xn2, fc_w_ref[...],
                  preferred_element_type=f32) + fc_b_ref[...]
    hid = _new_gelu(hid).astype(bf16)
    mo = jnp.dot(hid, mproj_w_ref[...],
                 preferred_element_type=f32) + mproj_b_ref[...]
    h_ref[...] = x + mo                     # residual carried in VMEM scratch

    @pl.when(layer == n_layer - 1)
    def _emit():
        hout_ref[...] = h_ref[...]


def lm_head_kernel(h_ref, lnf_w_ref, lnf_b_ref, lm_w_ref, out_ref):
    xf = _layer_norm(h_ref[...], lnf_w_ref[...],
                     lnf_b_ref[...]).astype(jnp.bfloat16)
    out_ref[...] = jnp.dot(xf, lm_w_ref[...],
                           preferred_element_type=jnp.float32)


# ----------------------------------------------------------------- wrapper

def gpt_forward(params, x, cfg):
    B, T, Din = x.shape
    C = cfg["n_embd"]
    nH = cfg["n_head"]
    hd = C // nH
    L = cfg["n_layer"]
    Dout = cfg["output_dim"]
    assert T <= cfg["block_size"]
    assert C % nH == 0

    M = B * T
    Dpad = _round_up(Dout, 128)             # lane-dense lm_head stores
    capacity = _vmem_capacity_bytes()

    # --- per-generation VMEM budgeting for the fused layer sweep ---
    # double-buffered per-layer weight blocks (bf16 matmuls = 24*C^2 B/layer)
    layer_stream_bytes = 2 * (24 * C * C + 13 * C * 4)
    # per-row VMEM (f32): residual scratch (C) + double-buffered h-in / h-out
    # blocks (4C) + live working values (qkv 3C + hid 4C + attn y C)
    per_row_bytes = (1 + 4 + 8) * C * 4
    vmem_budget = max(int(0.7 * capacity) - (4 << 20), 4 << 20)
    TM = _pick_m_tile(B, T, layer_stream_bytes, per_row_bytes, vmem_budget)
    num_m = M // TM
    # TODO(synk): for C >= ~1024 on v7x (64 MiB VMEM) additionally K-tile
    # fc_w/mproj_w along the 4C axis with an inner pl.loop / emit_pipeline.

    need = layer_stream_bytes + TM * per_row_bytes + (4 << 20)
    vmem_limit = int(min(capacity * 9 // 10, max(2 * need, 32 << 20)))

    # ---- host-side layout plumbing (cheap, one-off) ----
    x2 = x.reshape(M, Din)
    pos2 = jnp.tile(params["wpe"][:T], (B, 1))                    # (M, C)
    lm_w_pad = jnp.zeros((C, Dpad), jnp.bfloat16).at[:, :Dout].set(params["lm_w"])

    # ---------------- 1. token + positional embedding ----------------
    m_map = lambda m: (m, 0)
    h0 = pl.pallas_call(
        embed_kernel,
        out_shape=jax.ShapeDtypeStruct((M, C), jnp.float32),
        grid=(num_m,),
        in_specs=[pl.BlockSpec((TM, Din), m_map),
                  pl.BlockSpec((TM, C), m_map),
                  pl.BlockSpec((Din, C), lambda m: (0, 0)),
                  pl.BlockSpec((1, C), lambda m: (0, 0))],
        out_specs=pl.BlockSpec((TM, C), m_map),
        compiler_params=pltpu.CompilerParams(
            dimension_semantics=("parallel",)),
    )(x2, pos2, params["wte_w"], params["wte_b"])

    # ---------------- 2. fused transformer layer sweep ----------------
    act_map = lambda m, l: (m, 0)
    layer_map = lambda m, l: (l, 0, 0)
    in_specs = [
        pl.BlockSpec((TM, C), act_map),                # h0 (read at layer 0)
        pl.BlockSpec((None, 1, C), layer_map),         # ln1_w
        pl.BlockSpec((None, 1, C), layer_map),         # ln1_b
        pl.BlockSpec((None, C, 3 * C), layer_map),     # attn_w
        pl.BlockSpec((None, 1, 3 * C), layer_map),     # attn_b
        pl.BlockSpec((None, C, C), layer_map),         # proj_w
        pl.BlockSpec((None, 1, C), layer_map),         # proj_b
        pl.BlockSpec((None, 1, C), layer_map),         # ln2_w
        pl.BlockSpec((None, 1, C), layer_map),         # ln2_b
        pl.BlockSpec((None, C, 4 * C), layer_map),     # fc_w
        pl.BlockSpec((None, 1, 4 * C), layer_map),     # fc_b
        pl.BlockSpec((None, 4 * C, C), layer_map),     # mproj_w
        pl.BlockSpec((None, 1, C), layer_map),         # mproj_b
    ]
    # TODO(synk): on 128-MiB-VMEM parts (v5e/v6e) the big weight specs can use
    # pipeline_mode=pl.Buffered(3) to hide the per-layer weight DMA deeper.

    per_layer_keys = ("ln1_w", "ln1_b", "attn_w", "attn_b", "proj_w", "proj_b",
                      "ln2_w", "ln2_b", "fc_w", "fc_b", "mproj_w", "mproj_b")

    def _nbytes(a):
        return int(np.prod(a.shape)) * jnp.dtype(a.dtype).itemsize

    flops = L * (24 * M * C * C + 4 * M * T * C)
    transcendentals = L * (M * T * nH + 4 * M * C)
    bytes_accessed = (num_m * sum(_nbytes(params[k]) for k in per_layer_keys)
                      + 2 * M * C * 4)

    h_final = pl.pallas_call(
        functools.partial(layers_kernel, n_head=nH, head_dim=hd, seq_len=T),
        out_shape=jax.ShapeDtypeStruct((M, C), jnp.float32),
        grid=(num_m, L),
        in_specs=in_specs,
        out_specs=pl.BlockSpec((TM, C), act_map),
        scratch_shapes=[pltpu.VMEM((TM, C), jnp.float32)],   # residual stream
        compiler_params=pltpu.CompilerParams(
            dimension_semantics=("parallel", "arbitrary"),
            vmem_limit_bytes=vmem_limit),
        cost_estimate=pl.CostEstimate(flops=int(flops),
                                      transcendentals=int(transcendentals),
                                      bytes_accessed=int(bytes_accessed)),
    )(h0, *[params[k] for k in per_layer_keys])

    # ---------------- 3. final LayerNorm + lm_head ----------------
    TN = 128
    for cand in range(min(Dpad, 2048), 127, -128):
        if Dpad % cand == 0:
            TN = cand
            break
    num_n = Dpad // TN
    logits_pad = pl.pallas_call(
        lm_head_kernel,
        out_shape=jax.ShapeDtypeStruct((M, Dpad), jnp.float32),
        grid=(num_m, num_n),
        in_specs=[pl.BlockSpec((TM, C), lambda m, n: (m, 0)),
                  pl.BlockSpec((1, C), lambda m, n: (0, 0)),
                  pl.BlockSpec((1, C), lambda m, n: (0, 0)),
                  pl.BlockSpec((C, TN), lambda m, n: (0, n))],
        out_specs=pl.BlockSpec((TM, TN), lambda m, n: (m, n)),
        compiler_params=pltpu.CompilerParams(
            dimension_semantics=("parallel", "parallel")),
    )(h_final, params["lnf_w"], params["lnf_b"], lm_w_pad)

    return logits_pad[:, :Dout].reshape(B, T, Dout)


# -------------------------------------------------------------- param init

def init_params(key, cfg):
    C = cfg["n_embd"]
    L = cfg["n_layer"]
    Din, Dout = cfg["input_dim"], cfg["output_dim"]
    bf16, f32 = jnp.bfloat16, jnp.float32

    def nrm(k, shape, std=0.02, dtype=f32):
        return (std * jax.random.normal(k, shape, f32)).astype(dtype)

    ks = jax.random.split(key, 7)
    proj_std = 0.02 / math.sqrt(2 * L)
    return {
        # embeddings / final norm / head (matmul weights bf16, rest f32)
        "wte_w": nrm(ks[0], (Din, C), dtype=bf16),
        "wte_b": jnp.zeros((1, C), f32),
        "wpe": nrm(ks[1], (cfg["block_size"], C)),
        "lnf_w": jnp.ones((1, C), f32),
        "lnf_b": jnp.zeros((1, C), f32),
        "lm_w": nrm(ks[2], (C, Dout), dtype=bf16),
        # per-layer weights stacked on a leading L axis for weight streaming
        "ln1_w": jnp.ones((L, 1, C), f32),
        "ln1_b": jnp.zeros((L, 1, C), f32),
        "attn_w": nrm(ks[3], (L, C, 3 * C), dtype=bf16),
        "attn_b": jnp.zeros((L, 1, 3 * C), f32),
        "proj_w": nrm(ks[4], (L, C, C), proj_std, dtype=bf16),
        "proj_b": jnp.zeros((L, 1, C), f32),
        "ln2_w": jnp.ones((L, 1, C), f32),
        "ln2_b": jnp.zeros((L, 1, C), f32),
        "fc_w": nrm(ks[5], (L, C, 4 * C), dtype=bf16),
        "fc_b": jnp.zeros((L, 1, 4 * C), f32),
        "mproj_w": nrm(ks[6], (L, 4 * C, C), proj_std, dtype=bf16),
        "mproj_b": jnp.zeros((L, 1, C), f32),
    }


# ------------------------------------------------------- pure-JAX reference

def _lin(x2, w_bf16, b=None):
    out = jnp.dot(x2.astype(jnp.bfloat16), w_bf16,
                  preferred_element_type=jnp.float32)
    return out if b is None else out + b


def gpt_ref(params, x, cfg):
    C = cfg["n_embd"]
    nH = cfg["n_head"]
    hd = C // nH
    L = cfg["n_layer"]
    B, T, Din = x.shape
    bf16, f32 = jnp.bfloat16, jnp.float32

    h = _lin(x.reshape(B * T, Din), params["wte_w"], params["wte_b"])
    h = (h + jnp.tile(params["wpe"][:T], (B, 1))).reshape(B, T, C)

    causal = jnp.tril(jnp.ones((T, T), bool))
    scale = 1.0 / math.sqrt(hd)
    for l in range(L):
        xn = _layer_norm(h, params["ln1_w"][l], params["ln1_b"][l])
        qkv = _lin(xn.reshape(B * T, C), params["attn_w"][l],
                   params["attn_b"][l]).reshape(B, T, 3 * C)
        q, k, v = jnp.split(qkv, 3, axis=-1)
        sh = lambda a: a.reshape(B, T, nH, hd).transpose(0, 2, 1, 3).astype(bf16)
        q, k, v = sh(q), sh(k), sh(v)
        att = jnp.einsum("bhtd,bhsd->bhts", q, k,
                         preferred_element_type=f32) * scale
        att = jnp.where(causal, att, -jnp.inf)
        att = att - jnp.max(att, axis=-1, keepdims=True)
        p = jnp.exp(att)
        p = p / jnp.sum(p, axis=-1, keepdims=True)
        y = jnp.einsum("bhts,bhsd->bhtd", p.astype(bf16), v,
                       preferred_element_type=f32)
        y = y.transpose(0, 2, 1, 3).reshape(B * T, C)
        h = h + _lin(y, params["proj_w"][l], params["proj_b"][l]).reshape(B, T, C)
        xn2 = _layer_norm(h, params["ln2_w"][l], params["ln2_b"][l])
        hid = _new_gelu(_lin(xn2.reshape(B * T, C), params["fc_w"][l],
                             params["fc_b"][l]))
        h = h + _lin(hid, params["mproj_w"][l],
                     params["mproj_b"][l]).reshape(B, T, C)
    hf = _layer_norm(h, params["lnf_w"], params["lnf_b"])
    return _lin(hf.reshape(B * T, C), params["lm_w"]).reshape(B, T, cfg["output_dim"])


# ----------------------------------------------------------------- main

if __name__ == "__main__":
    cfg = dict(input_dim=16, output_dim=10, block_size=16,
               n_layer=2, n_head=4, n_embd=32, dropout=0.0)
    B, T = 2, 8

    key = jax.random.PRNGKey(0)
    k_inp, k_par = jax.random.split(key)
    x = jax.random.normal(k_inp, (B, T, cfg["input_dim"]), jnp.float32)
    params = init_params(k_par, cfg)

    fwd = jax.jit(functools.partial(gpt_forward, cfg=cfg))
    logits = jax.block_until_ready(fwd(params, x))
    assert logits.shape == (B, T, cfg["output_dim"])

    ref = jax.block_until_ready(gpt_ref(params, x, cfg))
    # 5e-3 tolerance: kernel uses the approximate EUP reciprocal for the
    # softmax denominator (perf); everything else matches the bf16 reference.
    np.testing.assert_allclose(np.asarray(logits), np.asarray(ref),
                               rtol=5e-3, atol=5e-3)
    print("KERNEL_OK")
</pallas_src>

<mosaic_0001>
module attributes {stable_mosaic.version = 11 : i64} {
  func.func @embed_kernel(%arg0: i32, %arg1: memref<8x16xf32, #tpu.memory_space<vmem>>, %arg2: memref<8x32xf32, #tpu.memory_space<vmem>>, %arg3: memref<16x32xbf16, #tpu.memory_space<vmem>>, %arg4: memref<1x32xf32, #tpu.memory_space<vmem>>, %arg5: memref<8x32xf32, #tpu.memory_space<vmem>>) attributes {dimension_semantics = [#tpu.dimension_semantics<parallel>], iteration_bounds = array<i64: 2>, scalar_prefetch = 0 : i64, scratch_operands = 0 : i64, tpu.core_type = #tpu.core_type<tc>, window_params = [{transform_indices = @transform_0, window_bounds = array<i64: 8, 16>}, {transform_indices = @transform_1, window_bounds = array<i64: 8, 32>}, {pipeline_mode = #tpu.pipeline_mode<synchronous>, transform_indices = @transform_2, window_bounds = array<i64: 16, 32>}, {pipeline_mode = #tpu.pipeline_mode<synchronous>, transform_indices = @transform_3, window_bounds = array<i64: 1, 32>}, {transform_indices = @transform_4, window_bounds = array<i64: 8, 32>}]} {
    %c0 = arith.constant 0 : index
    %c0_0 = arith.constant 0 : index
    %0 = vector.load %arg1[%c0, %c0_0] : memref<8x16xf32, #tpu.memory_space<vmem>>, vector<8x16xf32>
    %1 = arith.truncf %0 : vector<8x16xf32> to vector<8x16xbf16>
    %c0_1 = arith.constant 0 : index
    %c0_2 = arith.constant 0 : index
    %2 = vector.load %arg3[%c0_1, %c0_2] : memref<16x32xbf16, #tpu.memory_space<vmem>>, vector<16x32xbf16>
    %cst = arith.constant dense<0.000000e+00> : vector<8x32xf32>
    %3 = tpu.matmul %1, %2, %cst {dimension_numbers = #tpu.dot_dimension_numbers<[1], [0], [0], [1], [0, 0, 1, 1], [], []>} : vector<8x16xbf16>, vector<16x32xbf16>, vector<8x32xf32> -> vector<8x32xf32>
    %c0_3 = arith.constant 0 : index
    %c0_4 = arith.constant 0 : index
    %4 = vector.load %arg4[%c0_3, %c0_4] : memref<1x32xf32, #tpu.memory_space<vmem>>, vector<1x32xf32>
    %5 = vector.broadcast %4 : vector<1x32xf32> to vector<8x32xf32>
    %6 = arith.addf %3, %5 : vector<8x32xf32>
    %c0_5 = arith.constant 0 : index
    %c0_6 = arith.constant 0 : index
    %7 = vector.load %arg2[%c0_5, %c0_6] : memref<8x32xf32, #tpu.memory_space<vmem>>, vector<8x32xf32>
    %8 = arith.addf %6, %7 : vector<8x32xf32>
    %c0_7 = arith.constant 0 : index
    %c0_8 = arith.constant 0 : index
    %9 = vector.load %arg5[%c0_7, %c0_8] : memref<8x32xf32, #tpu.memory_space<vmem>>, vector<8x32xf32>
    tpu.vector_store %arg5[%c0_7, %c0_8], %8 {strides = array<i32>} : memref<8x32xf32, #tpu.memory_space<vmem>>, vector<8x32xf32>,
    return
  }
  func.func @transform_0(%arg0: i32) -> (i32, i32) {
    %c0_i32 = arith.constant 0 : i32
    %c0_i32_0 = arith.constant 0 : i32
    return %arg0, %c0_i32 : i32, i32
  }
  func.func @transform_1(%arg0: i32) -> (i32, i32) {
    %c0_i32 = arith.constant 0 : i32
    %c0_i32_0 = arith.constant 0 : i32
    return %arg0, %c0_i32 : i32, i32
  }
  func.func @transform_2(%arg0: i32) -> (i32, i32) {
    %c0_i32 = arith.constant 0 : i32
    %c0_i32_0 = arith.constant 0 : i32
    %c0_i32_1 = arith.constant 0 : i32
    return %c0_i32, %c0_i32_0 : i32, i32
  }
  func.func @transform_3(%arg0: i32) -> (i32, i32) {
    %c0_i32 = arith.constant 0 : i32
    %c0_i32_0 = arith.constant 0 : i32
    %c0_i32_1 = arith.constant 0 : i32
    return %c0_i32, %c0_i32_0 : i32, i32
  }
  func.func @transform_4(%arg0: i32) -> (i32, i32) {
    %c0_i32 = arith.constant 0 : i32
    %c0_i32_0 = arith.constant 0 : i32
    return %arg0, %c0_i32 : i32, i32
  }
}

module attributes {stable_mosaic.version = 11 : i64} {
  func.func @layers_kernel(%arg0: i32, %arg1: i32, %arg2: memref<8x32xf32, #tpu.memory_space<vmem>>, %arg3: memref<1x1x32xf32, #tpu.memory_space<vmem>>, %arg4: memref<1x1x32xf32, #tpu.memory_space<vmem>>, %arg5: memref<1x32x96xbf16, #tpu.memory_space<vmem>>, %arg6: memref<1x1x96xf32, #tpu.memory_space<vmem>>, %arg7: memref<1x32x32xbf16, #tpu.memory_space<vmem>>, %arg8: memref<1x1x32xf32, #tpu.memory_space<vmem>>, %arg9: memref<1x1x32xf32, #tpu.memory_space<vmem>>, %arg10: memref<1x1x32xf32, #tpu.memory_space<vmem>>, %arg11: memref<1x32x128xbf16, #tpu.memory_space<vmem>>, %arg12: memref<1x1x128xf32, #tpu.memory_space<vmem>>, %arg13: memref<1x128x32xbf16, #tpu.memory_space<vmem>>, %arg14: memref<1x1x32xf32, #tpu.memory_space<vmem>>, %arg15: memref<8x32xf32, #tpu.memory_space<vmem>>, %arg16: memref<8x32xf32, #tpu.memory_space<vmem>>) attributes {dimension_semantics = [#tpu.dimension_semantics<parallel>, #tpu.dimension_semantics<arbitrary>], iteration_bounds = array<i64: 2, 2>, scalar_prefetch = 0 : i64, scratch_operands = 1 : i64, tpu.core_type = #tpu.core_type<tc>, window_params = [{transform_indices = @transform_0, window_bounds = array<i64: 8, 32>}, {transform_indices = @transform_1, window_bounds = array<i64: 1, 1, 32>}, {transform_indices = @transform_2, window_bounds = array<i64: 1, 1, 32>}, {transform_indices = @transform_3, window_bounds = array<i64: 1, 32, 96>}, {transform_indices = @transform_4, window_bounds = array<i64: 1, 1, 96>}, {transform_indices = @transform_5, window_bounds = array<i64: 1, 32, 32>}, {transform_indices = @transform_6, window_bounds = array<i64: 1, 1, 32>}, {transform_indices = @transform_7, window_bounds = array<i64: 1, 1, 32>}, {transform_indices = @transform_8, window_bounds = array<i64: 1, 1, 32>}, {transform_indices = @transform_9, window_bounds = array<i64: 1, 32, 128>}, {transform_indices = @transform_10, window_bounds = array<i64: 1, 1, 128>}, {transform_indices = @transform_11, window_bounds = array<i64: 1, 128, 32>}, {transform_indices = @transform_12, window_bounds = array<i64: 1, 1, 32>}, {transform_indices = @transform_13, window_bounds = array<i64: 8, 32>}]} {
    %c0_i32 = arith.constant 0 : i32
    %0 = arith.cmpi eq, %arg1, %c0_i32 : i32
    %1 = arith.extui %0 : i1 to i32
    %c0_i32_0 = arith.constant 0 : i32
    %2 = arith.cmpi ne, %1, %c0_i32_0 : i32
    scf.if %2 {
      %c0_82 = arith.constant 0 : index
      %c0_83 = arith.constant 0 : index
      %215 = vector.load %arg2[%c0_82, %c0_83] : memref<8x32xf32, #tpu.memory_space<vmem>>, vector<8x32xf32>
      %c0_84 = arith.constant 0 : index
      %c0_85 = arith.constant 0 : index
      %216 = vector.load %arg16[%c0_84, %c0_85] : memref<8x32xf32, #tpu.memory_space<vmem>>, vector<8x32xf32>
      tpu.vector_store %arg16[%c0_84, %c0_85], %215 {strides = array<i32>} : memref<8x32xf32, #tpu.memory_space<vmem>>, vector<8x32xf32>,
    } else {
    }
    %c0 = arith.constant 0 : index
    %c0_1 = arith.constant 0 : index
    %3 = vector.load %arg16[%c0, %c0_1] : memref<8x32xf32, #tpu.memory_space<vmem>>, vector<8x32xf32>
    %c0_2 = arith.constant 0 : index
    %c0_3 = arith.constant 0 : index
    %c0_4 = arith.constant 0 : index
    %4 = vector.load %arg3[%c0_2, %c0_3, %c0_4] : memref<1x1x32xf32, #tpu.memory_space<vmem>>, vector<1x1x32xf32>
    %5 = vector.shape_cast %4 : vector<1x1x32xf32> to vector<1x32xf32>
    %c0_5 = arith.constant 0 : index
    %c0_6 = arith.constant 0 : index
    %c0_7 = arith.constant 0 : index
    %6 = vector.load %arg4[%c0_5, %c0_6, %c0_7] : memref<1x1x32xf32, #tpu.memory_space<vmem>>, vector<1x1x32xf32>
    %7 = vector.shape_cast %6 : vector<1x1x32xf32> to vector<1x32xf32>
    %cst = arith.constant dense<0.000000e+00> : vector<8xf32>
    %8 = vector.multi_reduction <add>, %3, %cst [1] : vector<8x32xf32> to vector<8xf32>
    %9 = vector.shape_cast %8 : vector<8xf32> to vector<8x1xf32>
    %cst_8 = arith.constant 3.200000e+01 : f32
    %10 = vector.broadcast %cst_8 : f32 to vector<8x1xf32>
    %11 = arith.divf %9, %10 : vector<8x1xf32>
    %12 = vector.broadcast %11 : vector<8x1xf32> to vector<8x32xf32>
    %13 = arith.subf %3, %12 : vector<8x32xf32>
    %14 = arith.mulf %13, %13 : vector<8x32xf32>
    %cst_9 = arith.constant dense<0.000000e+00> : vector<8xf32>
    %15 = vector.multi_reduction <add>, %14, %cst_9 [1] : vector<8x32xf32> to vector<8xf32>
    %16 = vector.shape_cast %15 : vector<8xf32> to vector<8x1xf32>
    %cst_10 = arith.constant 3.200000e+01 : f32
    %17 = vector.broadcast %cst_10 : f32 to vector<8x1xf32>
    %18 = arith.divf %16, %17 : vector<8x1xf32>
    %cst_11 = arith.constant 9.99999974E-6 : f32
    %19 = vector.broadcast %cst_11 : f32 to vector<8x1xf32>
    %20 = arith.addf %18, %19 : vector<8x1xf32>
    %21 = math.rsqrt %20 : vector<8x1xf32>
    %22 = vector.broadcast %21 : vector<8x1xf32> to vector<8x32xf32>
    %23 = arith.mulf %13, %22 : vector<8x32xf32>
    %24 = vector.broadcast %5 : vector<1x32xf32> to vector<8x32xf32>
    %25 = arith.mulf %23, %24 : vector<8x32xf32>
    %26 = vector.broadcast %7 : vector<1x32xf32> to vector<8x32xf32>
    %27 = arith.addf %25, %26 : vector<8x32xf32>
    %28 = arith.truncf %27 : vector<8x32xf32> to vector<8x32xbf16>
    %c0_12 = arith.constant 0 : index
    %c0_13 = arith.constant 0 : index
    %c0_14 = arith.constant 0 : index
    %29 = vector.load %arg5[%c0_12, %c0_13, %c0_14] : memref<1x32x96xbf16, #tpu.memory_space<vmem>>, vector<1x32x96xbf16>
    %30 = vector.shape_cast %29 : vector<1x32x96xbf16> to vector<32x96xbf16>
    %cst_15 = arith.constant dense<0.000000e+00> : vector<8x96xf32>
    %31 = tpu.matmul %28, %30, %cst_15 {dimension_numbers = #tpu.dot_dimension_numbers<[1], [0], [0], [1], [0, 0, 1, 1], [], []>} : vector<8x32xbf16>, vector<32x96xbf16>, vector<8x96xf32> -> vector<8x96xf32>
    %c0_16 = arith.constant 0 : index
    %c0_17 = arith.constant 0 : index
    %c0_18 = arith.constant 0 : index
    %32 = vector.load %arg6[%c0_16, %c0_17, %c0_18] : memref<1x1x96xf32, #tpu.memory_space<vmem>>, vector<1x1x96xf32>
    %33 = vector.shape_cast %32 : vector<1x1x96xf32> to vector<1x96xf32>
    %34 = vector.broadcast %33 : vector<1x96xf32> to vector<8x96xf32>
    %35 = arith.addf %31, %34 : vector<8x96xf32>
    %36 = tpu.iota {dimensions = array<i32: 1>} : vector<1x8x8xi32>
    %37 = tpu.iota {dimensions = array<i32: 2>} : vector<1x8x8xi32>
    %38 = arith.cmpi sge, %36, %37 : vector<1x8x8xi32>
    %39 = vector.extract_strided_slice %35 {offsets = [0, 0], sizes = [8, 8], strides = [1, 1]} : vector<8x96xf32> to vector<8x8xf32>
    %40 = vector.shape_cast %39 : vector<8x8xf32> to vector<1x8x8xf32>
    %41 = arith.truncf %40 : vector<1x8x8xf32> to vector<1x8x8xbf16>
    %42 = vector.extract_strided_slice %35 {offsets = [0, 32], sizes = [8, 8], strides = [1, 1]} : vector<8x96xf32> to vector<8x8xf32>
    %43 = vector.shape_cast %42 : vector<8x8xf32> to vector<1x8x8xf32>
    %44 = arith.truncf %43 : vector<1x8x8xf32> to vector<1x8x8xbf16>
    %45 = vector.extract_strided_slice %35 {offsets = [0, 64], sizes = [8, 8], strides = [1, 1]} : vector<8x96xf32> to vector<8x8xf32>
    %46 = vector.shape_cast %45 : vector<8x8xf32> to vector<1x8x8xf32>
    %47 = arith.truncf %46 : vector<1x8x8xf32> to vector<1x8x8xbf16>
    "tpu.trace_start"() <{level = 10 : i32, message = "bqd,bkd->bqk"}> : () -> ()
    %cst_19 = arith.constant dense<0.000000e+00> : vector<1x8x8xf32>
    %48 = tpu.matmul %41, %44, %cst_19 {dimension_numbers = #tpu.dot_dimension_numbers<[2], [2], [1], [1], [0, 0, 0, 1, 1, 1], [0], [0]>} : vector<1x8x8xbf16>, vector<1x8x8xbf16>, vector<1x8x8xf32> -> vector<1x8x8xf32>
    "tpu.trace_stop"() : () -> ()
    %cst_20 = arith.constant 0.353553385 : f32
    %49 = vector.broadcast %cst_20 : f32 to vector<1x8x8xf32>
    %50 = arith.mulf %48, %49 : vector<1x8x8xf32>
    %cst_21 = arith.constant -1.000000e+30 : f32
    %51 = vector.broadcast %cst_21 : f32 to vector<1x8x8xf32>
    %52 = arith.select %38, %50, %51 : vector<1x8x8xi1>, vector<1x8x8xf32>
    %cst_22 = arith.constant dense<0xFF800000> : vector<1x8xf32>
    %53 = vector.multi_reduction <maximumf>, %52, %cst_22 [2] : vector<1x8x8xf32> to vector<1x8xf32>
    %54 = vector.shape_cast %53 : vector<1x8xf32> to vector<1x8x1xf32>
    %55 = vector.broadcast %54 : vector<1x8x1xf32> to vector<1x8x8xf32>
    %56 = arith.subf %52, %55 : vector<1x8x8xf32>
    %57 = math.exp %56 : vector<1x8x8xf32>
    %cst_23 = arith.constant dense<0.000000e+00> : vector<1x8xf32>
    %58 = vector.multi_reduction <add>, %57, %cst_23 [2] : vector<1x8x8xf32> to vector<1x8xf32>
    %59 = vector.shape_cast %58 : vector<1x8xf32> to vector<1x8x1xf32>
    %60 = tpu.reciprocal %59 {approx = true} : vector<1x8x1xf32> -> vector<1x8x1xf32>
    %61 = vector.broadcast %60 : vector<1x8x1xf32> to vector<1x8x8xf32>
    %62 = arith.mulf %57, %61 : vector<1x8x8xf32>
    %63 = arith.truncf %62 : vector<1x8x8xf32> to vector<1x8x8xbf16>
    "tpu.trace_start"() <{level = 10 : i32, message = "bqk,bkd->bqd"}> : () -> ()
    %cst_24 = arith.constant dense<0.000000e+00> : vector<1x8x8xf32>
    %64 = tpu.matmul %63, %47, %cst_24 {dimension_numbers = #tpu.dot_dimension_numbers<[2], [1], [1], [2], [0, 0, 0, 1, 1, 2], [0], [0]>} : vector<1x8x8xbf16>, vector<1x8x8xbf16>, vector<1x8x8xf32> -> vector<1x8x8xf32>
    "tpu.trace_stop"() : () -> ()
    %65 = vector.shape_cast %64 : vector<1x8x8xf32> to vector<8x8xf32>
    %66 = vector.extract_strided_slice %35 {offsets = [0, 8], sizes = [8, 8], strides = [1, 1]} : vector<8x96xf32> to vector<8x8xf32>
    %67 = vector.shape_cast %66 : vector<8x8xf32> to vector<1x8x8xf32>
    %68 = arith.truncf %67 : vector<1x8x8xf32> to vector<1x8x8xbf16>
    %69 = vector.extract_strided_slice %35 {offsets = [0, 40], sizes = [8, 8], strides = [1, 1]} : vector<8x96xf32> to vector<8x8xf32>
    %70 = vector.shape_cast %69 : vector<8x8xf32> to vector<1x8x8xf32>
    %71 = arith.truncf %70 : vector<1x8x8xf32> to vector<1x8x8xbf16>
    %72 = vector.extract_strided_slice %35 {offsets = [0, 72], sizes = [8, 8], strides = [1, 1]} : vector<8x96xf32> to vector<8x8xf32>
    %73 = vector.shape_cast %72 : vector<8x8xf32> to vector<1x8x8xf32>
    %74 = arith.truncf %73 : vector<1x8x8xf32> to vector<1x8x8xbf16>
    "tpu.trace_start"() <{level = 10 : i32, message = "bqd,bkd->bqk"}> : () -> ()
    %cst_25 = arith.constant dense<0.000000e+00> : vector<1x8x8xf32>
    %75 = tpu.matmul %68, %71, %cst_25 {dimension_numbers = #tpu.dot_dimension_numbers<[2], [2], [1], [1], [0, 0, 0, 1, 1, 1], [0], [0]>} : vector<1x8x8xbf16>, vector<1x8x8xbf16>, vector<1x8x8xf32> -> vector<1x8x8xf32>
    "tpu.trace_stop"() : () -> ()
    %cst_26 = arith.constant 0.353553385 : f32
    %76 = vector.broadcast %cst_26 : f32 to vector<1x8x8xf32>
    %77 = arith.mulf %75, %76 : vector<1x8x8xf32>
    %cst_27 = arith.constant -1.000000e+30 : f32
    %78 = vector.broadcast %cst_27 : f32 to vector<1x8x8xf32>
    %79 = arith.select %38, %77, %78 : vector<1x8x8xi1>, vector<1x8x8xf32>
    %cst_28 = arith.constant dense<0xFF800000> : vector<1x8xf32>
    %80 = vector.multi_reduction <maximumf>, %79, %cst_28 [2] : vector<1x8x8xf32> to vector<1x8xf32>
    %81 = vector.shape_cast %80 : vector<1x8xf32> to vector<1x8x1xf32>
    %82 = vector.broadcast %81 : vector<1x8x1xf32> to vector<1x8x8xf32>
    %83 = arith.subf %79, %82 : vector<1x8x8xf32>
    %84 = math.exp %83 : vector<1x8x8xf32>
    %cst_29 = arith.constant dense<0.000000e+00> : vector<1x8xf32>
    %85 = vector.multi_reduction <add>, %84, %cst_29 [2] : vector<1x8x8xf32> to vector<1x8xf32>
    %86 = vector.shape_cast %85 : vector<1x8xf32> to vector<1x8x1xf32>
    %87 = tpu.reciprocal %86 {approx = true} : vector<1x8x1xf32> -> vector<1x8x1xf32>
    %88 = vector.broadcast %87 : vector<1x8x1xf32> to vector<1x8x8xf32>
    %89 = arith.mulf %84, %88 : vector<1x8x8xf32>
    %90 = arith.truncf %89 : vector<1x8x8xf32> to vector<1x8x8xbf16>
    "tpu.trace_start"() <{level = 10 : i32, message = "bqk,bkd->bqd"}> : () -> ()
    %cst_30 = arith.constant dense<0.000000e+00> : vector<1x8x8xf32>
    %91 = tpu.matmul %90, %74, %cst_30 {dimension_numbers = #tpu.dot_dimension_numbers<[2], [1], [1], [2], [0, 0, 0, 1, 1, 2], [0], [0]>} : vector<1x8x8xbf16>, vector<1x8x8xbf16>, vector<1x8x8xf32> -> vector<1x8x8xf32>
    "tpu.trace_stop"() : () -> ()
    %92 = vector.shape_cast %91 : vector<1x8x8xf32> to vector<8x8xf32>
    %93 = vector.extract_strided_slice %35 {offsets = [0, 16], sizes = [8, 8], strides = [1, 1]} : vector<8x96xf32> to vector<8x8xf32>
    %94 = vector.shape_cast %93 : vector<8x8xf32> to vector<1x8x8xf32>
    %95 = arith.truncf %94 : vector<1x8x8xf32> to vector<1x8x8xbf16>
    %96 = vector.extract_strided_slice %35 {offsets = [0, 48], sizes = [8, 8], strides = [1, 1]} : vector<8x96xf32> to vector<8x8xf32>
    %97 = vector.shape_cast %96 : vector<8x8xf32> to vector<1x8x8xf32>
    %98 = arith.truncf %97 : vector<1x8x8xf32> to vector<1x8x8xbf16>
    %99 = vector.extract_strided_slice %35 {offsets = [0, 80], sizes = [8, 8], strides = [1, 1]} : vector<8x96xf32> to vector<8x8xf32>
    %100 = vector.shape_cast %99 : vector<8x8xf32> to vector<1x8x8xf32>
    %101 = arith.truncf %100 : vector<1x8x8xf32> to vector<1x8x8xbf16>
    "tpu.trace_start"() <{level = 10 : i32, message = "bqd,bkd->bqk"}> : () -> ()
    %cst_31 = arith.constant dense<0.000000e+00> : vector<1x8x8xf32>
    %102 = tpu.matmul %95, %98, %cst_31 {dimension_numbers = #tpu.dot_dimension_numbers<[2], [2], [1], [1], [0, 0, 0, 1, 1, 1], [0], [0]>} : vector<1x8x8xbf16>, vector<1x8x8xbf16>, vector<1x8x8xf32> -> vector<1x8x8xf32>
    "tpu.trace_stop"() : () -> ()
    %cst_32 = arith.constant 0.353553385 : f32
    %103 = vector.broadcast %cst_32 : f32 to vector<1x8x8xf32>
    %104 = arith.mulf %102, %103 : vector<1x8x8xf32>
    %cst_33 = arith.constant -1.000000e+30 : f32
    %105 = vector.broadcast %cst_33 : f32 to vector<1x8x8xf32>
    %106 = arith.select %38, %104, %105 : vector<1x8x8xi1>, vector<1x8x8xf32>
    %cst_34 = arith.constant dense<0xFF800000> : vector<1x8xf32>
    %107 = vector.multi_reduction <maximumf>, %106, %cst_34 [2] : vector<1x8x8xf32> to vector<1x8xf32>
    %108 = vector.shape_cast %107 : vector<1x8xf32> to vector<1x8x1xf32>
    %109 = vector.broadcast %108 : vector<1x8x1xf32> to vector<1x8x8xf32>
    %110 = arith.subf %106, %109 : vector<1x8x8xf32>
    %111 = math.exp %110 : vector<1x8x8xf32>
    %cst_35 = arith.constant dense<0.000000e+00> : vector<1x8xf32>
    %112 = vector.multi_reduction <add>, %111, %cst_35 [2] : vector<1x8x8xf32> to vector<1x8xf32>
    %113 = vector.shape_cast %112 : vector<1x8xf32> to vector<1x8x1xf32>
    %114 = tpu.reciprocal %113 {approx = true} : vector<1x8x1xf32> -> vector<1x8x1xf32>
    %115 = vector.broadcast %114 : vector<1x8x1xf32> to vector<1x8x8xf32>
    %116 = arith.mulf %111, %115 : vector<1x8x8xf32>
    %117 = arith.truncf %116 : vector<1x8x8xf32> to vector<1x8x8xbf16>
    "tpu.trace_start"() <{level = 10 : i32, message = "bqk,bkd->bqd"}> : () -> ()
    %cst_36 = arith.constant dense<0.000000e+00> : vector<1x8x8xf32>
    %118 = tpu.matmul %117, %101, %cst_36 {dimension_numbers = #tpu.dot_dimension_numbers<[2], [1], [1], [2], [0, 0, 0, 1, 1, 2], [0], [0]>} : vector<1x8x8xbf16>, vector<1x8x8xbf16>, vector<1x8x8xf32> -> vector<1x8x8xf32>
    "tpu.trace_stop"() : () -> ()
    %119 = vector.shape_cast %118 : vector<1x8x8xf32> to vector<8x8xf32>
    %120 = vector.extract_strided_slice %35 {offsets = [0, 24], sizes = [8, 8], strides = [1, 1]} : vector<8x96xf32> to vector<8x8xf32>
    %121 = vector.shape_cast %120 : vector<8x8xf32> to vector<1x8x8xf32>
    %122 = arith.truncf %121 : vector<1x8x8xf32> to vector<1x8x8xbf16>
    %123 = vector.extract_strided_slice %35 {offsets = [0, 56], sizes = [8, 8], strides = [1, 1]} : vector<8x96xf32> to vector<8x8xf32>
    %124 = vector.shape_cast %123 : vector<8x8xf32> to vector<1x8x8xf32>
    %125 = arith.truncf %124 : vector<1x8x8xf32> to vector<1x8x8xbf16>
    %126 = vector.extract_strided_slice %35 {offsets = [0, 88], sizes = [8, 8], strides = [1, 1]} : vector<8x96xf32> to vector<8x8xf32>
    %127 = vector.shape_cast %126 : vector<8x8xf32> to vector<1x8x8xf32>
    %128 = arith.truncf %127 : vector<1x8x8xf32> to vector<1x8x8xbf16>
    "tpu.trace_start"() <{level = 10 : i32, message = "bqd,bkd->bqk"}> : () -> ()
    %cst_37 = arith.constant dense<0.000000e+00> : vector<1x8x8xf32>
    %129 = tpu.matmul %122, %125, %cst_37 {dimension_numbers = #tpu.dot_dimension_numbers<[2], [2], [1], [1], [0, 0, 0, 1, 1, 1], [0], [0]>} : vector<1x8x8xbf16>, vector<1x8x8xbf16>, vector<1x8x8xf32> -> vector<1x8x8xf32>
    "tpu.trace_stop"() : () -> ()
    %cst_38 = arith.constant 0.353553385 : f32
    %130 = vector.broadcast %cst_38 : f32 to vector<1x8x8xf32>
    %131 = arith.mulf %129, %130 : vector<1x8x8xf32>
    %cst_39 = arith.constant -1.000000e+30 : f32
    %132 = vector.broadcast %cst_39 : f32 to vector<1x8x8xf32>
    %133 = arith.select %38, %131, %132 : vector<1x8x8xi1>, vector<1x8x8xf32>
    %cst_40 = arith.constant dense<0xFF800000> : vector<1x8xf32>
    %134 = vector.multi_reduction <maximumf>, %133, %cst_40 [2] : vector<1x8x8xf32> to vector<1x8xf32>
    %135 = vector.shape_cast %134 : vector<1x8xf32> to vector<1x8x1xf32>
    %136 = vector.broadcast %135 : vector<1x8x1xf32> to vector<1x8x8xf32>
    %137 = arith.subf %133, %136 : vector<1x8x8xf32>
    %138 = math.exp %137 : vector<1x8x8xf32>
    %cst_41 = arith.constant dense<0.000000e+00> : vector<1x8xf32>
    %139 = vector.multi_reduction <add>, %138, %cst_41 [2] : vector<1x8x8xf32> to vector<1x8xf32>
    %140 = vector.shape_cast %139 : vector<1x8xf32> to vector<1x8x1xf32>
    %141 = tpu.reciprocal %140 {approx = true} : vector<1x8x1xf32> -> vector<1x8x1xf32>
    %142 = vector.broadcast %141 : vector<1x8x1xf32> to vector<1x8x8xf32>
    %143 = arith.mulf %138, %142 : vector<1x8x8xf32>
    %144 = arith.truncf %143 : vector<1x8x8xf32> to vector<1x8x8xbf16>
    "tpu.trace_start"() <{level = 10 : i32, message = "bqk,bkd->bqd"}> : () -> ()
    %cst_42 = arith.constant dense<0.000000e+00> : vector<1x8x8xf32>
    %145 = tpu.matmul %144, %128, %cst_42 {dimension_numbers = #tpu.dot_dimension_numbers<[2], [1], [1], [2], [0, 0, 0, 1, 1, 2], [0], [0]>} : vector<1x8x8xbf16>, vector<1x8x8xbf16>, vector<1x8x8xf32> -> vector<1x8x8xf32>
    "tpu.trace_stop"() : () -> ()
    %146 = vector.shape_cast %145 : vector<1x8x8xf32> to vector<8x8xf32>
    %147 = tpu.concatenate %65, %92, %119, %146 in 1 : vector<8x8xf32>, vector<8x8xf32>, vector<8x8xf32>, vector<8x8xf32> -> vector<8x32xf32>
    %148 = arith.truncf %147 : vector<8x32xf32> to vector<8x32xbf16>
    %c0_43 = arith.constant 0 : index
    %c0_44 = arith.constant 0 : index
    %c0_45 = arith.constant 0 : index
    %149 = vector.load %arg7[%c0_43, %c0_44, %c0_45] : memref<1x32x32xbf16, #tpu.memory_space<vmem>>, vector<1x32x32xbf16>
    %150 = vector.shape_cast %149 : vector<1x32x32xbf16> to vector<32x32xbf16>
    %cst_46 = arith.constant dense<0.000000e+00> : vector<8x32xf32>
    %151 = tpu.matmul %148, %150, %cst_46 {dimension_numbers = #tpu.dot_dimension_numbers<[1], [0], [0], [1], [0, 0, 1, 1], [], []>} : vector<8x32xbf16>, vector<32x32xbf16>, vector<8x32xf32> -> vector<8x32xf32>
    %152 = arith.addf %3, %151 : vector<8x32xf32>
    %c0_47 = arith.constant 0 : index
    %c0_48 = arith.constant 0 : index
    %c0_49 = arith.constant 0 : index
    %153 = vector.load %arg8[%c0_47, %c0_48, %c0_49] : memref<1x1x32xf32, #tpu.memory_space<vmem>>, vector<1x1x32xf32>
    %154 = vector.shape_cast %153 : vector<1x1x32xf32> to vector<1x32xf32>
    %155 = vector.broadcast %154 : vector<1x32xf32> to vector<8x32xf32>
    %156 = arith.addf %152, %155 : vector<8x32xf32>
    %c0_50 = arith.constant 0 : index
    %c0_51 = arith.constant 0 : index
    %c0_52 = arith.constant 0 : index
    %157 = vector.load %arg9[%c0_50, %c0_51, %c0_52] : memref<1x1x32xf32, #tpu.memory_space<vmem>>, vector<1x1x32xf32>
    %158 = vector.shape_cast %157 : vector<1x1x32xf32> to vector<1x32xf32>
    %c0_53 = arith.constant 0 : index
    %c0_54 = arith.constant 0 : index
    %c0_55 = arith.constant 0 : index
    %159 = vector.load %arg10[%c0_53, %c0_54, %c0_55] : memref<1x1x32xf32, #tpu.memory_space<vmem>>, vector<1x1x32xf32>
    %160 = vector.shape_cast %159 : vector<1x1x32xf32> to vector<1x32xf32>
    %cst_56 = arith.constant dense<0.000000e+00> : vector<8xf32>
    %161 = vector.multi_reduction <add>, %156, %cst_56 [1] : vector<8x32xf32> to vector<8xf32>
    %162 = vector.shape_cast %161 : vector<8xf32> to vector<8x1xf32>
    %cst_57 = arith.constant 3.200000e+01 : f32
    %163 = vector.broadcast %cst_57 : f32 to vector<8x1xf32>
    %164 = arith.divf %162, %163 : vector<8x1xf32>
    %165 = vector.broadcast %164 : vector<8x1xf32> to vector<8x32xf32>
    %166 = arith.subf %156, %165 : vector<8x32xf32>
    %167 = arith.mulf %166, %166 : vector<8x32xf32>
    %cst_58 = arith.constant dense<0.000000e+00> : vector<8xf32>
    %168 = vector.multi_reduction <add>, %167, %cst_58 [1] : vector<8x32xf32> to vector<8xf32>
    %169 = vector.shape_cast %168 : vector<8xf32> to vector<8x1xf32>
    %cst_59 = arith.constant 3.200000e+01 : f32
    %170 = vector.broadcast %cst_59 : f32 to vector<8x1xf32>
    %171 = arith.divf %169, %170 : vector<8x1xf32>
    %cst_60 = arith.constant 9.99999974E-6 : f32
    %172 = vector.broadcast %cst_60 : f32 to vector<8x1xf32>
    %173 = arith.addf %171, %172 : vector<8x1xf32>
    %174 = math.rsqrt %173 : vector<8x1xf32>
    %175 = vector.broadcast %174 : vector<8x1xf32> to vector<8x32xf32>
    %176 = arith.mulf %166, %175 : vector<8x32xf32>
    %177 = vector.broadcast %158 : vector<1x32xf32> to vector<8x32xf32>
    %178 = arith.mulf %176, %177 : vector<8x32xf32>
    %179 = vector.broadcast %160 : vector<1x32xf32> to vector<8x32xf32>
    %180 = arith.addf %178, %179 : vector<8x32xf32>
    %181 = arith.truncf %180 : vector<8x32xf32> to vector<8x32xbf16>
    %c0_61 = arith.constant 0 : index
    %c0_62 = arith.constant 0 : index
    %c0_63 = arith.constant 0 : index
    %182 = vector.load %arg11[%c0_61, %c0_62, %c0_63] : memref<1x32x128xbf16, #tpu.memory_space<vmem>>, vector<1x32x128xbf16>
    %183 = vector.shape_cast %182 : vector<1x32x128xbf16> to vector<32x128xbf16>
    %cst_64 = arith.constant dense<0.000000e+00> : vector<8x128xf32>
    %184 = tpu.matmul %181, %183, %cst_64 {dimension_numbers = #tpu.dot_dimension_numbers<[1], [0], [0], [1], [0, 0, 1, 1], [], []>} : vector<8x32xbf16>, vector<32x128xbf16>, vector<8x128xf32> -> vector<8x128xf32>
    %c0_65 = arith.constant 0 : index
    %c0_66 = arith.constant 0 : index
    %c0_67 = arith.constant 0 : index
    %185 = vector.load %arg12[%c0_65, %c0_66, %c0_67] : memref<1x1x128xf32, #tpu.memory_space<vmem>>, vector<1x1x128xf32>
    %186 = vector.shape_cast %185 : vector<1x1x128xf32> to vector<1x128xf32>
    %187 = vector.broadcast %186 : vector<1x128xf32> to vector<8x128xf32>
    %188 = arith.addf %184, %187 : vector<8x128xf32>
    %cst_68 = arith.constant 5.000000e-01 : f32
    %189 = vector.broadcast %cst_68 : f32 to vector<8x128xf32>
    %190 = arith.mulf %189, %188 : vector<8x128xf32>
    %cst_69 = arith.constant 4.471500e-02 : f32
    %191 = vector.broadcast %cst_69 : f32 to vector<8x128xf32>
    %192 = arith.mulf %191, %188 : vector<8x128xf32>
    %193 = arith.mulf %192, %188 : vector<8x128xf32>
    %194 = arith.mulf %193, %188 : vector<8x128xf32>
    %195 = arith.addf %188, %194 : vector<8x128xf32>
    %cst_70 = arith.constant 0.797884583 : f32
    %196 = vector.broadcast %cst_70 : f32 to vector<8x128xf32>
    %197 = arith.mulf %196, %195 : vector<8x128xf32>
    %198 = math.tanh %197 : vector<8x128xf32>
    %cst_71 = arith.constant 1.000000e+00 : f32
    %199 = vector.broadcast %cst_71 : f32 to vector<8x128xf32>
    %200 = arith.addf %199, %198 : vector<8x128xf32>
    %201 = arith.mulf %190, %200 : vector<8x128xf32>
    %202 = arith.truncf %201 : vector<8x128xf32> to vector<8x128xbf16>
    %c0_72 = arith.constant 0 : index
    %c0_73 = arith.constant 0 : index
    %c0_74 = arith.constant 0 : index
    %203 = vector.load %arg13[%c0_72, %c0_73, %c0_74] : memref<1x128x32xbf16, #tpu.memory_space<vmem>>, vector<1x128x32xbf16>
    %204 = vector.shape_cast %203 : vector<1x128x32xbf16> to vector<128x32xbf16>
    %cst_75 = arith.constant dense<0.000000e+00> : vector<8x32xf32>
    %205 = tpu.matmul %202, %204, %cst_75 {dimension_numbers = #tpu.dot_dimension_numbers<[1], [0], [0], [1], [0, 0, 1, 1], [], []>} : vector<8x128xbf16>, vector<128x32xbf16>, vector<8x32xf32> -> vector<8x32xf32>
    %c0_76 = arith.constant 0 : index
    %c0_77 = arith.constant 0 : index
    %c0_78 = arith.constant 0 : index
    %206 = vector.load %arg14[%c0_76, %c0_77, %c0_78] : memref<1x1x32xf32, #tpu.memory_space<vmem>>, vector<1x1x32xf32>
    %207 = vector.shape_cast %206 : vector<1x1x32xf32> to vector<1x32xf32>
    %208 = vector.broadcast %207 : vector<1x32xf32> to vector<8x32xf32>
    %209 = arith.addf %205, %208 : vector<8x32xf32>
    %210 = arith.addf %156, %209 : vector<8x32xf32>
    %c0_79 = arith.constant 0 : index
    %c0_80 = arith.constant 0 : index
    %211 = vector.load %arg16[%c0_79, %c0_80] : memref<8x32xf32, #tpu.memory_space<vmem>>, vector<8x32xf32>
    tpu.vector_store %arg16[%c0_79, %c0_80], %210 {strides = array<i32>} : memref<8x32xf32, #tpu.memory_space<vmem>>, vector<8x32xf32>,
    %c1_i32 = arith.constant 1 : i32
    %212 = arith.cmpi eq, %arg1, %c1_i32 : i32
    %213 = arith.extui %212 : i1 to i32
    %c0_i32_81 = arith.constant 0 : i32
    %214 = arith.cmpi ne, %213, %c0_i32_81 : i32
    scf.if %214 {
      %c0_82 = arith.constant 0 : index
      %c0_83 = arith.constant 0 : index
      %215 = vector.load %arg16[%c0_82, %c0_83] : memref<8x32xf32, #tpu.memory_space<vmem>>, vector<8x32xf32>
      %c0_84 = arith.constant 0 : index
      %c0_85 = arith.constant 0 : index
      %216 = vector.load %arg15[%c0_84, %c0_85] : memref<8x32xf32, #tpu.memory_space<vmem>>, vector<8x32xf32>
      tpu.vector_store %arg15[%c0_84, %c0_85], %215 {strides = array<i32>} : memref<8x32xf32, #tpu.memory_space<vmem>>, vector<8x32xf32>,
    } else {
    }
    return
  }
  func.func @transform_0(%arg0: i32, %arg1: i32) -> (i32, i32) {
    %c0_i32 = arith.constant 0 : i32
    %c0_i32_0 = arith.constant 0 : i32
    return %arg0, %c0_i32 : i32, i32
  }
  func.func @transform_1(%arg0: i32, %arg1: i32) -> (i32, i32, i32) {
    %c0_i32 = arith.constant 0 : i32
    %c0_i32_0 = arith.constant 0 : i32
    %c0_i32_1 = arith.constant 0 : i32
    return %arg1, %c0_i32, %c0_i32_0 : i32, i32, i32
  }
  func.func @transform_2(%arg0: i32, %arg1: i32) -> (i32, i32, i32) {
    %c0_i32 = arith.constant 0 : i32
    %c0_i32_0 = arith.constant 0 : i32
    %c0_i32_1 = arith.constant 0 : i32
    return %arg1, %c0_i32, %c0_i32_0 : i32, i32, i32
  }
  func.func @transform_3(%arg0: i32, %arg1: i32) -> (i32, i32, i32) {
    %c0_i32 = arith.constant 0 : i32
    %c0_i32_0 = arith.constant 0 : i32
    %c0_i32_1 = arith.constant 0 : i32
    return %arg1, %c0_i32, %c0_i32_0 : i32, i32, i32
  }
  func.func @transform_4(%arg0: i32, %arg1: i32) -> (i32, i32, i32) {
    %c0_i32 = arith.constant 0 : i32
    %c0_i32_0 = arith.constant 0 : i32
    %c0_i32_1 = arith.constant 0 : i32
    return %arg1, %c0_i32, %c0_i32_0 : i32, i32, i32
  }
  func.func @transform_5(%arg0: i32, %arg1: i32) -> (i32, i32, i32) {
    %c0_i32 = arith.constant 0 : i32
    %c0_i32_0 = arith.constant 0 : i32
    %c0_i32_1 = arith.constant 0 : i32
    return %arg1, %c0_i32, %c0_i32_0 : i32, i32, i32
  }
  func.func @transform_6(%arg0: i32, %arg1: i32) -> (i32, i32, i32) {
    %c0_i32 = arith.constant 0 : i32
    %c0_i32_0 = arith.constant 0 : i32
    %c0_i32_1 = arith.constant 0 : i32
    return %arg1, %c0_i32, %c0_i32_0 : i32, i32, i32
  }
  func.func @transform_7(%arg0: i32, %arg1: i32) -> (i32, i32, i32) {
    %c0_i32 = arith.constant 0 : i32
    %c0_i32_0 = arith.constant 0 : i32
    %c0_i32_1 = arith.constant 0 : i32
    return %arg1, %c0_i32, %c0_i32_0 : i32, i32, i32
  }
  func.func @transform_8(%arg0: i32, %arg1: i32) -> (i32, i32, i32) {
    %c0_i32 = arith.constant 0 : i32
    %c0_i32_0 = arith.constant 0 : i32
    %c0_i32_1 = arith.constant 0 : i32
    return %arg1, %c0_i32, %c0_i32_0 : i32, i32, i32
  }
  func.func @transform_9(%arg0: i32, %arg1: i32) -> (i32, i32, i32) {
    %c0_i32 = arith.constant 0 : i32
    %c0_i32_0 = arith.constant 0 : i32
    %c0_i32_1 = arith.constant 0 : i32
    return %arg1, %c0_i32, %c0_i32_0 : i32, i32, i32
  }
  func.func @transform_10(%arg0: i32, %arg1: i32) -> (i32, i32, i32) {
    %c0_i32 = arith.constant 0 : i32
    %c0_i32_0 = arith.constant 0 : i32
    %c0_i32_1 = arith.constant 0 : i32
    return %arg1, %c0_i32, %c0_i32_0 : i32, i32, i32
  }
  func.func @transform_11(%arg0: i32, %arg1: i32) -> (i32, i32, i32) {
    %c0_i32 = arith.constant 0 : i32
    %c0_i32_0 = arith.constant 0 : i32
    %c0_i32_1 = arith.constant 0 : i32
    return %arg1, %c0_i32, %c0_i32_0 : i32, i32, i32
  }
  func.func @transform_12(%arg0: i32, %arg1: i32) -> (i32, i32, i32) {
    %c0_i32 = arith.constant 0 : i32
    %c0_i32_0 = arith.constant 0 : i32
    %c0_i32_1 = arith.constant 0 : i32
    return %arg1, %c0_i32, %c0_i32_0 : i32, i32, i32
  }
  func.func @transform_13(%arg0: i32, %arg1: i32) -> (i32, i32) {
    %c0_i32 = arith.constant 0 : i32
    %c0_i32_0 = arith.constant 0 : i32
    return %arg0, %c0_i32 : i32, i32
  }
}

module attributes {stable_mosaic.version = 11 : i64} {
  func.func @lm_head_kernel(%arg0: i32, %arg1: i32, %arg2: memref<8x32xf32, #tpu.memory_space<vmem>>, %arg3: memref<1x32xf32, #tpu.memory_space<vmem>>, %arg4: memref<1x32xf32, #tpu.memory_space<vmem>>, %arg5: memref<32x128xbf16, #tpu.memory_space<vmem>>, %arg6: memref<8x128xf32, #tpu.memory_space<vmem>>) attributes {dimension_semantics = [#tpu.dimension_semantics<parallel>, #tpu.dimension_semantics<parallel>], iteration_bounds = array<i64: 2, 1>, scalar_prefetch = 0 : i64, scratch_operands = 0 : i64, tpu.core_type = #tpu.core_type<tc>, window_params = [{transform_indices = @transform_0, window_bounds = array<i64: 8, 32>}, {pipeline_mode = #tpu.pipeline_mode<synchronous>, transform_indices = @transform_1, window_bounds = array<i64: 1, 32>}, {pipeline_mode = #tpu.pipeline_mode<synchronous>, transform_indices = @transform_2, window_bounds = array<i64: 1, 32>}, {transform_indices = @transform_3, window_bounds = array<i64: 32, 128>}, {transform_indices = @transform_4, window_bounds = array<i64: 8, 128>}]} {
    %c0 = arith.constant 0 : index
    %c0_0 = arith.constant 0 : index
    %0 = vector.load %arg2[%c0, %c0_0] : memref<8x32xf32, #tpu.memory_space<vmem>>, vector<8x32xf32>
    %c0_1 = arith.constant 0 : index
    %c0_2 = arith.constant 0 : index
    %1 = vector.load %arg3[%c0_1, %c0_2] : memref<1x32xf32, #tpu.memory_space<vmem>>, vector<1x32xf32>
    %c0_3 = arith.constant 0 : index
    %c0_4 = arith.constant 0 : index
    %2 = vector.load %arg4[%c0_3, %c0_4] : memref<1x32xf32, #tpu.memory_space<vmem>>, vector<1x32xf32>
    %cst = arith.constant dense<0.000000e+00> : vector<8xf32>
    %3 = vector.multi_reduction <add>, %0, %cst [1] : vector<8x32xf32> to vector<8xf32>
    %4 = vector.shape_cast %3 : vector<8xf32> to vector<8x1xf32>
    %cst_5 = arith.constant 3.200000e+01 : f32
    %5 = vector.broadcast %cst_5 : f32 to vector<8x1xf32>
    %6 = arith.divf %4, %5 : vector<8x1xf32>
    %7 = vector.broadcast %6 : vector<8x1xf32> to vector<8x32xf32>
    %8 = arith.subf %0, %7 : vector<8x32xf32>
    %9 = arith.mulf %8, %8 : vector<8x32xf32>
    %cst_6 = arith.constant dense<0.000000e+00> : vector<8xf32>
    %10 = vector.multi_reduction <add>, %9, %cst_6 [1] : vector<8x32xf32> to vector<8xf32>
    %11 = vector.shape_cast %10 : vector<8xf32> to vector<8x1xf32>
    %cst_7 = arith.constant 3.200000e+01 : f32
    %12 = vector.broadcast %cst_7 : f32 to vector<8x1xf32>
    %13 = arith.divf %11, %12 : vector<8x1xf32>
    %cst_8 = arith.constant 9.99999974E-6 : f32
    %14 = vector.broadcast %cst_8 : f32 to vector<8x1xf32>
    %15 = arith.addf %13, %14 : vector<8x1xf32>
    %16 = math.rsqrt %15 : vector<8x1xf32>
    %17 = vector.broadcast %16 : vector<8x1xf32> to vector<8x32xf32>
    %18 = arith.mulf %8, %17 : vector<8x32xf32>
    %19 = vector.broadcast %1 : vector<1x32xf32> to vector<8x32xf32>
    %20 = arith.mulf %18, %19 : vector<8x32xf32>
    %21 = vector.broadcast %2 : vector<1x32xf32> to vector<8x32xf32>
    %22 = arith.addf %20, %21 : vector<8x32xf32>
    %23 = arith.truncf %22 : vector<8x32xf32> to vector<8x32xbf16>
    %c0_9 = arith.constant 0 : index
    %c0_10 = arith.constant 0 : index
    %24 = vector.load %arg5[%c0_9, %c0_10] : memref<32x128xbf16, #tpu.memory_space<vmem>>, vector<32x128xbf16>
    %cst_11 = arith.constant dense<0.000000e+00> : vector<8x128xf32>
    %25 = tpu.matmul %23, %24, %cst_11 {dimension_numbers = #tpu.dot_dimension_numbers<[1], [0], [0], [1], [0, 0, 1, 1], [], []>} : vector<8x32xbf16>, vector<32x128xbf16>, vector<8x128xf32> -> vector<8x128xf32>
    %c0_12 = arith.constant 0 : index
    %c0_13 = arith.constant 0 : index
    %26 = vector.load %arg6[%c0_12, %c0_13] : memref<8x128xf32, #tpu.memory_space<vmem>>, vector<8x128xf32>
    tpu.vector_store %arg6[%c0_12, %c0_13], %25 {strides = array<i32>} : memref<8x128xf32, #tpu.memory_space<vmem>>, vector<8x128xf32>,
    return
  }
  func.func @transform_0(%arg0: i32, %arg1: i32) -> (i32, i32) {
    %c0_i32 = arith.constant 0 : i32
    %c0_i32_0 = arith.constant 0 : i32
    return %arg0, %c0_i32 : i32, i32
  }
  func.func @transform_1(%arg0: i32, %arg1: i32) -> (i32, i32) {
    %c0_i32 = arith.constant 0 : i32
    %c0_i32_0 = arith.constant 0 : i32
    %c0_i32_1 = arith.constant 0 : i32
    return %c0_i32, %c0_i32_0 : i32, i32
  }
  func.func @transform_2(%arg0: i32, %arg1: i32) -> (i32, i32) {
    %c0_i32 = arith.constant 0 : i32
    %c0_i32_0 = arith.constant 0 : i32
    %c0_i32_1 = arith.constant 0 : i32
    return %c0_i32, %c0_i32_0 : i32, i32
  }
  func.func @transform_3(%arg0: i32, %arg1: i32) -> (i32, i32) {
    %c0_i32 = arith.constant 0 : i32
    %c0_i32_0 = arith.constant 0 : i32
    return %c0_i32, %arg1 : i32, i32
  }
  func.func @transform_4(%arg0: i32, %arg1: i32) -> (i32, i32) {
    %c0_i32 = arith.constant 0 : i32
    return %arg0, %arg1 : i32, i32
  }
}

</mosaic_0001>

<llo_original>
// kernel: gpt_forward.3
$region0: #{gpt_forward.3}
  #allocation0 [shape = 'u32[]', space=smem, size = 0x4, offset = 0x4, fixed_abs, tag = 'smem constant byte address 0x4 - core index']
  #allocation1 [shape = 'u32[144,128]{1,0:T(1,128)}', space=vmem, size = 0x12000, scoped, tag = 'internal scratch']
  %s0 = inlined_call_operand.vmem [shape: f32[16,16], index: 0, kind: input, shape index: {}]
  %s1 = inlined_call_operand.vmem [shape: f32[16,32], index: 1, kind: input, shape index: {}]
  %s2 = inlined_call_operand.vmem [shape: bf16[16,32], index: 2, kind: input, shape index: {}]
  %s3 = inlined_call_operand.vmem [shape: f32[1,32], index: 3, kind: input, shape index: {}]
  %s4 = inlined_call_operand.vmem [shape: f32[16,32], index: 4, kind: output, shape index: {}]
  %s5 = sld [smem:[#allocation0]]
  $region49: #{gpt_forward.3} parent=0
    _
  %s7 = ssub.s32 1, %s5
  %s8 = scalar_select 0, %s7, %s5
  loop: start=0, step=1, limit=4
  $region2: #{gpt_forward.3} parent=0 // loop_pre_header
    _
  $region3: #{gpt_forward.3} parent=0 // loop_header
    %s10 = sphi 0, %s14
    %p11 = scmp.ge.s32.totalorder %s10, 4
    %s20 = sphi 0, %s22
    %s23 = sphi 0, %s20
    %s24 = sphi 0, %s23
    %s40 = sphi 0, %s24
    %s46 = sphi 0, %s48
    %s49 = sphi 0, %s46
    %s50 = sphi 0, %s49
    %s66 = sphi 0, %s50
    %s70 = sphi 0, %s70
    %s72 = sphi 0, %s70
    %s73 = sphi 0, %s72
    %s87 = sphi 0, %s73
    %s91 = sphi 0, %s91
    %s93 = sphi 0, %s91
    %s94 = sphi 0, %s93
    %s108 = sphi 0, %s94
    %s114 = sphi 0, %s116
    %s117 = sphi 0, %s114
    %s118 = sphi 0, %s117
    %s134 = sphi 0, %s118
  $region4: #{gpt_forward.3} parent=0 // loop_header_branch
    %13 = sbr.rel (%p11) target = $region8
  $region5: #{gpt_forward.3} parent=0 // loop_body
    %s15 = ssub.s32 %s10, 1
    %s16 = ssub.s32 %s10, 2
    %s17 = sadd.s32 %s10, 1
    %s18 = ssub.s32 %s10, %s17
    %p19 = scmp.eq.s32.totalorder %s18, 0
    %s21 = sadd.s32 %s20, 1
    %s22 = scalar_select %p19, %s20, %s21
    %p25 = pneg %p19
    %p26 = scmp.eq.s32.totalorder %s10, 1
    %p27 = por %p25, %p26
    %p28 = scmp.ne.s32.totalorder %s20, %s23
    %p29 = scmp.eq.s32.totalorder %s10, 0
    %p30 = por %p28, %p29
    %p31 = scmp.ne.s32.totalorder %s20, %s23
    %p32 = scmp.eq.s32.totalorder %s15, 1
    %p33 = por %p31, %p32
    %p34 = scmp.ne.s32.totalorder %s23, %s24
    %p35 = scmp.eq.s32.totalorder %s15, 0
    %p36 = por %p34, %p35
    %p37 = scmp.ne.s32.totalorder %s23, %s24
    %p38 = scmp.eq.s32.totalorder %s16, 1
    %p39 = por %p37, %p38
    %p41 = scmp.ne.s32.totalorder %s24, %s40
    %p42 = scmp.eq.s32.totalorder %s16, 0
    %p43 = por %p41, %p42
    %s44 = ssub.s32 %s10, %s17
    %p45 = scmp.eq.s32.totalorder %s44, 0
    %s47 = sadd.s32 %s46, 1
    %s48 = scalar_select %p45, %s46, %s47
    %p51 = pneg %p45
    %p52 = scmp.eq.s32.totalorder %s10, 1
    %p53 = por %p51, %p52
    %p54 = scmp.ne.s32.totalorder %s46, %s49
    %p55 = scmp.eq.s32.totalorder %s10, 0
    %p56 = por %p54, %p55
    %p57 = scmp.ne.s32.totalorder %s46, %s49
    %p58 = scmp.eq.s32.totalorder %s15, 1
    %p59 = por %p57, %p58
    %p60 = scmp.ne.s32.totalorder %s49, %s50
    %p61 = scmp.eq.s32.totalorder %s15, 0
    %p62 = por %p60, %p61
    %p63 = scmp.ne.s32.totalorder %s49, %s50
    %p64 = scmp.eq.s32.totalorder %s16, 1
    %p65 = por %p63, %p64
    %p67 = scmp.ne.s32.totalorder %s50, %s66
    %p68 = scmp.eq.s32.totalorder %s16, 0
    %p69 = por %p67, %p68
    %s71 = sadd.s32 %s70, 1
    %p74 = scmp.eq.s32.totalorder %s10, 1
    %p75 = scmp.ne.s32.totalorder %s70, %s72
    %p76 = scmp.eq.s32.totalorder %s10, 0
    %p77 = por %p75, %p76
    %p78 = scmp.ne.s32.totalorder %s70, %s72
    %p79 = scmp.eq.s32.totalorder %s15, 1
    %p80 = por %p78, %p79
    %p81 = scmp.ne.s32.totalorder %s72, %s73
    %p82 = scmp.eq.s32.totalorder %s15, 0
    %p83 = por %p81, %p82
    %p84 = scmp.ne.s32.totalorder %s72, %s73
    %p85 = scmp.eq.s32.totalorder %s16, 1
    %p86 = por %p84, %p85
    %p88 = scmp.ne.s32.totalorder %s73, %s87
    %p89 = scmp.eq.s32.totalorder %s16, 0
    %p90 = por %p88, %p89
    %s92 = sadd.s32 %s91, 1
    %p95 = scmp.eq.s32.totalorder %s10, 1
    %p96 = scmp.ne.s32.totalorder %s91, %s93
    %p97 = scmp.eq.s32.totalorder %s10, 0
    %p98 = por %p96, %p97
    %p99 = scmp.ne.s32.totalorder %s91, %s93
    %p100 = scmp.eq.s32.totalorder %s15, 1
    %p101 = por %p99, %p100
    %p102 = scmp.ne.s32.totalorder %s93, %s94
    %p103 = scmp.eq.s32.totalorder %s15, 0
    %p104 = por %p102, %p103
    %p105 = scmp.ne.s32.totalorder %s93, %s94
    %p106 = scmp.eq.s32.totalorder %s16, 1
    %p107 = por %p105, %p106
    %p109 = scmp.ne.s32.totalorder %s94, %s108
    %p110 = scmp.eq.s32.totalorder %s16, 0
    %p111 = por %p109, %p110
    %s112 = ssub.s32 %s10, %s17
    %p113 = scmp.eq.s32.totalorder %s112, 0
    %s115 = sadd.s32 %s114, 1
    %s116 = scalar_select %p113, %s114, %s115
    %p119 = pneg %p113
    %p120 = scmp.eq.s32.totalorder %s10, 1
    %p121 = por %p119, %p120
    %p122 = scmp.ne.s32.totalorder %s114, %s117
    %p123 = scmp.eq.s32.totalorder %s10, 0
    %p124 = por %p122, %p123
    %p125 = scmp.ne.s32.totalorder %s114, %s117
    %p126 = scmp.eq.s32.totalorder %s15, 1
    %p127 = por %p125, %p126
    %p128 = scmp.ne.s32.totalorder %s117, %s118
    %p129 = scmp.eq.s32.totalorder %s15, 0
    %p130 = por %p128, %p129
    %p131 = scmp.ne.s32.totalorder %s117, %s118
    %p132 = scmp.eq.s32.totalorder %s16, 1
    %p133 = por %p131, %p132
    %p135 = scmp.ne.s32.totalorder %s118, %s134
    %p136 = scmp.eq.s32.totalorder %s16, 0
    %p137 = por %p135, %p136
    %p138 = scmp.le.s32.totalorder 1, %s10
    %p139 = scmp.lt.s32.totalorder %s10, 3
    %p140 = pnand %p138, %p139
    %p141 = pneg %p140
    // Predicated region
    $region9: #{gpt_forward.3} parent=5 // pred_check
      _
    $region10: #{gpt_forward.3} parent=5 // pred_check_branch
      %143 = sbr.rel (%p140) target = $region12
    $region11: #{gpt_forward.3} parent=5 // pred_region
      %s144 = ssub.s32 %s10, 1
      // Predicated region
      $region13: #{gpt_forward.3} parent=11 // pred_check
        %p145 = pneg %p83
      $region14: #{gpt_forward.3} parent=11 // pred_check_branch
        %147 = sbr.rel (%p145) target = $region16
      $region15: #{gpt_forward.3} parent=11 // pred_region
        _
      $region16: #{gpt_forward.3} parent=11 // pred_fallthru
        _
      // Predicated region
      $region17: #{gpt_forward.3} parent=11 // pred_check
        %p148 = pneg %p104
      $region18: #{gpt_forward.3} parent=11 // pred_check_branch
        %150 = sbr.rel (%p148) target = $region20
      $region19: #{gpt_forward.3} parent=11 // pred_region
        _
      $region20: #{gpt_forward.3} parent=11 // pred_fallthru
        _
    $region12: #{gpt_forward.3} parent=5 // pred_fallthru
      _
    %p151 = scmp.lt.s32.totalorder %s10, 2
    // Predicated region
    $region21: #{gpt_forward.3} parent=5 // pred_check
      %p152 = pneg %p151
    $region22: #{gpt_forward.3} parent=5 // pred_check_branch
      %154 = sbr.rel (%p152) target = $region24
    $region23: #{gpt_forward.3} parent=5 // pred_region
      // Predicated region
      $region25: #{gpt_forward.3} parent=23 // pred_check
        %p155 = pneg %p30
      $region26: #{gpt_forward.3} parent=23 // pred_check_branch
        %157 = sbr.rel (%p155) target = $region28
      $region27: #{gpt_forward.3} parent=23 // pred_region
        %p158 = scmp.lt.s32.totalorder %s10, 1
        %s159 = scalar_select %p158, %s10, 1
        %s160 = smul.addr %s159, 8
        %s161 = scalar_lea.vmem %s0, %s160
      $region28: #{gpt_forward.3} parent=23 // pred_fallthru
        _
      // Predicated region
      $region29: #{gpt_forward.3} parent=23 // pred_check
        %p162 = pneg %p56
      $region30: #{gpt_forward.3} parent=23 // pred_check_branch
        %164 = sbr.rel (%p162) target = $region32
      $region31: #{gpt_forward.3} parent=23 // pred_region
        %p165 = scmp.lt.s32.totalorder %s10, 1
        %s166 = scalar_select %p165, %s10, 1
        %s167 = smul.addr %s166, 8
        %s168 = scalar_lea.vmem %s1, %s167
      $region32: #{gpt_forward.3} parent=23 // pred_fallthru
        _
    $region24: #{gpt_forward.3} parent=5 // pred_fallthru
      _
    %p169 = scmp.le.s32.totalorder 1, %s10
    %p170 = scmp.lt.s32.totalorder %s10, 3
    %p171 = pnand %p169, %p170
    %p172 = pneg %p171
    // Predicated region
    $region33: #{gpt_forward.3} parent=5 // pred_check
      _
    $region34: #{gpt_forward.3} parent=5 // pred_check_branch
      %174 = sbr.rel (%p171) target = $region36
    $region35: #{gpt_forward.3} parent=5 // pred_region
      %s175 = ssub.s32 %s10, 1
      %p176 = scmp.lt.s32.totalorder %s15, 1
      %s177 = scalar_select %p176, %s15, 1
      %s178 = smul.addr %s177, 8
      %s179 = scalar_lea.vmem %s0, %s178
      %p180 = pneg %p36
      %p181 = pneg %p33
      %p182 = scmp.lt.s32.totalorder %s15, 1
      %s183 = scalar_select %p182, %s15, 1
      %s184 = smul.addr %s183, 8
      %s185 = scalar_lea.vmem %s1, %s184
      %p186 = pneg %p62
      %p187 = pneg %p59
      %p188 = pneg %p83
      %p189 = pneg %p80
      %p190 = pneg %p104
      %p191 = pneg %p101
      %p192 = pneg %p130
      %p193 = pneg %p127
      %p194 = scmp.lt.s32.totalorder %s15, 1
      %s195 = scalar_select %p194, %s15, 1
      %s196 = smul.addr %s195, 8
      %s197 = scalar_lea.vmem %s4, %s196
      %p198 = scmp.lt.s32.totalorder %s15, 1
      %s199 = scalar_select %p198, %s15, 1
      %s200 = smul.addr %s199, 8
      %s201 = scalar_lea.vmem %s0, %s200
      %p202 = scmp.lt.s32.totalorder %s15, 1
      %s203 = scalar_select %p202, %s15, 1
      %s204 = smul.addr %s203, 8
      %s205 = scalar_lea.vmem %s1, %s204
      %p206 = scmp.lt.s32.totalorder %s15, 1
      %s207 = scalar_select %p206, %s15, 1
      %s208 = smul.addr %s207, 8
      %s209 = scalar_lea.vmem %s4, %s208
      %v211 = vld [vmem:[%s201] sm:$0xff]
      %v212 = vpack.c.bf16 %v211, %v211
      %v213 = vld [vmem:[%s2] sm:$0xf]
      %v214 = vld [vmem:[%s2 + $0x4] sm:$0xf]
      %v215 = vld [vmem:[%s3] sm:$0x1]
      %v217 = vlaneseq
      %v218 = vshrl.u32 %v217, 7
      %v219 = vsub.s32 0, %v218
      %v220 = vrot.slane %v215, %v219
      %v224 = vunpack.c.l.b16 %v213
      %v225 = vunpack.c.l.b16 %v214
      %v226 = vpack.c.b16 %v225, %v224
      %vm228 = vcmask 130048
      %v230 = vsel %vm228, %v212, 0
      %232 = vmatprep.subr.bf16.mxu0 0
      %233 = vmatpush1.bf16.msra.mxu0 %v226
      %234 = vmatprep.subr.bf16.mxu0 0
      %235 = vmatpush1.bf16.msra.mxu0 0
      %236 = vmatprep.subr.bf16.mxu0 0
      %237 = vmatpush1.bf16.msra.mxu0 0
      %238 = vmatprep.subr.bf16.mxu0 0
      %239 = vmatpush1.bf16.msra.mxu0 0
      %240 = vmatprep.subr.bf16.mxu0 0
      %241 = vmatpush1.bf16.msra.mxu0 0
      %242 = vmatprep.subr.bf16.mxu0 0
      %243 = vmatpush1.bf16.msra.mxu0 0
      %244 = vmatprep.subr.bf16.mxu0 0
      %245 = vmatpush1.bf16.msra.mxu0 0
      %246 = vmatprep.subr.bf16.mxu0 0
      %247 = vmatpush1.bf16.msra.mxu0 0
      %248 = vmatprep.subr.bf16.mxu0 0
      %249 = vmatpush1.bf16.msra.mxu0 0
      %250 = vmatprep.subr.bf16.mxu0 0
      %251 = vmatpush1.bf16.msra.mxu0 0
      %252 = vmatprep.subr.bf16.mxu0 0
      %253 = vmatpush1.bf16.msra.mxu0 0
      %254 = vmatprep.subr.bf16.mxu0 0
      %255 = vmatpush1.bf16.msra.mxu0 0
      %256 = vmatprep.subr.bf16.mxu0 0
      %257 = vmatpush1.bf16.msra.mxu0 0
      %258 = vmatprep.subr.bf16.mxu0 0
      %259 = vmatpush1.bf16.msra.mxu0 0
      %260 = vmatprep.subr.bf16.mxu0 0
      %261 = vmatpush1.bf16.msra.mxu0 0
      %262 = vmatprep.subr.bf16.mxu0 0
      %263 = vmatpush1.bf16.msra.mxu0 0
      %264 = vmatprep.mubr.bf16.mxu0 0
      %265 = vmatmul.mubr.bf16.gmra.mrb[0].mxu0 %v230
      %v266 = vpop.f32.mrb[0].mxu0
      %v267 = vadd.f32 %v220, %v266
      %v268 = vpop.f32.mrb[0].mxu0
      %v269 = vpop.f32.mrb[0].mxu0
      %v270 = vpop.f32.mrb[0].mxu0
      %271 = vdwg.mxu0
      %v272 = vld [vmem:[%s205] sm:$0xff]
      %v273 = vadd.f32 %v267, %v272
      %vm274 = vcmask 261120
      %275 = vst.msk [vmem:[%s209] sm:$0xff] %vm274, %v273
      %p276 = scmp.lt.s32.totalorder %s15, 1
      %s277 = scalar_select %p276, %s15, 1
      %s278 = smul.addr %s277, 8
      %s279 = scalar_lea.vmem %s4, %s278
      // Predicated region
      $region37: #{gpt_forward.3} parent=35 // pred_check
        %p280 = pneg %p127
      $region38: #{gpt_forward.3} parent=35 // pred_check_branch
        %282 = sbr.rel (%p280) target = $region40
      $region39: #{gpt_forward.3} parent=35 // pred_region
        _
      $region40: #{gpt_forward.3} parent=35 // pred_fallthru
        _
    $region36: #{gpt_forward.3} parent=5 // pred_fallthru
      _
    %p283 = scmp.le.s32.totalorder 2, %s10
    // Predicated region
    $region41: #{gpt_forward.3} parent=5 // pred_check
      %p284 = pneg %p283
    $region42: #{gpt_forward.3} parent=5 // pred_check_branch
      %286 = sbr.rel (%p284) target = $region44
    $region43: #{gpt_forward.3} parent=5 // pred_region
      %s287 = ssub.s32 %s10, 2
      // Predicated region
      $region45: #{gpt_forward.3} parent=43 // pred_check
        %p288 = pneg %p133
      $region46: #{gpt_forward.3} parent=43 // pred_check_branch
        %290 = sbr.rel (%p288) target = $region48
      $region47: #{gpt_forward.3} parent=43 // pred_region
        %p291 = scmp.lt.s32.totalorder %s16, 1
        %s292 = scalar_select %p291, %s16, 1
        %s293 = smul.addr %s292, 8
        %s294 = scalar_lea.vmem %s4, %s293
      $region48: #{gpt_forward.3} parent=43 // pred_fallthru
        _
    $region44: #{gpt_forward.3} parent=5 // pred_fallthru
      _
  $region6: #{gpt_forward.3} parent=0 // loop_footer
    %s14 = sadd.s32 1, %s10
  $region7: #{gpt_forward.3} parent=0 // loop_footer_branch
    %9 = sbr.rel target = $region3
  $region8: #{gpt_forward.3} parent=0 // loop_exit
    _

// kernel: gpt_forward.5
$region0: #{gpt_forward.5}
  #allocation0 [shape = 'u32[]', space=smem, size = 0x4, offset = 0x4, fixed_abs, tag = 'smem constant byte address 0x4 - core index']
  #allocation1 [shape = 'u32[144,128]{1,0:T(1,128)}', space=vmem, size = 0x12000, scoped, tag = 'internal scratch']
  %s0 = inlined_call_operand.vmem [shape: f32[16,32], index: 0, kind: input, shape index: {}]
  %s1 = inlined_call_operand.vmem [shape: f32[1,32], index: 1, kind: input, shape index: {}]
  %s2 = inlined_call_operand.vmem [shape: f32[1,32], index: 2, kind: input, shape index: {}]
  %s3 = inlined_call_operand.vmem [shape: bf16[32,128], index: 3, kind: input, shape index: {}]
  %s4 = inlined_call_operand.vmem [shape: f32[16,128], index: 4, kind: output, shape index: {}]
  %s5 = sld [smem:[#allocation0]]
  $region49: #{gpt_forward.5} parent=0
    _
  %s7 = ssub.s32 1, %s5
  %s8 = scalar_select 0, %s7, %s5
  loop: start=0, step=1, limit=4
  $region2: #{gpt_forward.5} parent=0 // loop_pre_header
    _
  $region3: #{gpt_forward.5} parent=0 // loop_header
    %s10 = sphi 0, %s14
    %p11 = scmp.ge.s32.totalorder %s10, 4
    %s17 = sphi 0, %s29
    %s18 = sphi 0, %s25
    %s19 = sphi 0, %s17
    %s20 = sphi 0, %s18
    %s21 = sphi 0, %s19
    %s22 = sphi 0, %s20
    %s32 = sphi 0, %s34
    %s35 = sphi 0, %s32
    %s36 = sphi 0, %s35
    %s52 = sphi 0, %s36
    %s56 = sphi 0, %s56
    %s58 = sphi 0, %s56
    %s59 = sphi 0, %s58
    %s73 = sphi 0, %s59
    %s77 = sphi 0, %s77
    %s79 = sphi 0, %s77
    %s80 = sphi 0, %s79
    %s94 = sphi 0, %s80
    %s100 = sphi 0, %s102
    %s103 = sphi 0, %s100
    %s104 = sphi 0, %s103
    %s120 = sphi 0, %s104
    %s128 = sphi 0, %s130
    %s131 = sphi 0, %s128
    %s132 = sphi 0, %s131
    %s148 = sphi 0, %s132
  $region4: #{gpt_forward.5} parent=0 // loop_header_branch
    %13 = sbr.rel (%p11) target = $region8
  $region5: #{gpt_forward.5} parent=0 // loop_body
    %s15 = ssub.s32 %s10, 1
    %s16 = ssub.s32 %s10, 2
    %s23 = sadd.s32 1, %s18
    %p24 = scmp.ge.s32.totalorder %s23, 1
    %s25 = scalar_select %p24, 0, %s23
    %s26 = sadd.s32 1, %s17
    %s27 = scalar_select %p24, %s26, %s17
    %p28 = scmp.ge.s32.totalorder %s27, 2
    %s29 = scalar_select %p28, 0, %s27
    %s30 = ssub.s32 %s17, %s29
    %p31 = scmp.eq.s32.totalorder %s30, 0
    %s33 = sadd.s32 %s32, 1
    %s34 = scalar_select %p31, %s32, %s33
    %p37 = pneg %p31
    %p38 = scmp.eq.s32.totalorder %s10, 1
    %p39 = por %p37, %p38
    %p40 = scmp.ne.s32.totalorder %s32, %s35
    %p41 = scmp.eq.s32.totalorder %s10, 0
    %p42 = por %p40, %p41
    %p43 = scmp.ne.s32.totalorder %s32, %s35
    %p44 = scmp.eq.s32.totalorder %s15, 1
    %p45 = por %p43, %p44
    %p46 = scmp.ne.s32.totalorder %s35, %s36
    %p47 = scmp.eq.s32.totalorder %s15, 0
    %p48 = por %p46, %p47
    %p49 = scmp.ne.s32.totalorder %s35, %s36
    %p50 = scmp.eq.s32.totalorder %s16, 1
    %p51 = por %p49, %p50
    %p53 = scmp.ne.s32.totalorder %s36, %s52
    %p54 = scmp.eq.s32.totalorder %s16, 0
    %p55 = por %p53, %p54
    %s57 = sadd.s32 %s56, 1
    %p60 = scmp.eq.s32.totalorder %s10, 1
    %p61 = scmp.ne.s32.totalorder %s56, %s58
    %p62 = scmp.eq.s32.totalorder %s10, 0
    %p63 = por %p61, %p62
    %p64 = scmp.ne.s32.totalorder %s56, %s58
    %p65 = scmp.eq.s32.totalorder %s15, 1
    %p66 = por %p64, %p65
    %p67 = scmp.ne.s32.totalorder %s58, %s59
    %p68 = scmp.eq.s32.totalorder %s15, 0
    %p69 = por %p67, %p68
    %p70 = scmp.ne.s32.totalorder %s58, %s59
    %p71 = scmp.eq.s32.totalorder %s16, 1
    %p72 = por %p70, %p71
    %p74 = scmp.ne.s32.totalorder %s59, %s73
    %p75 = scmp.eq.s32.totalorder %s16, 0
    %p76 = por %p74, %p75
    %s78 = sadd.s32 %s77, 1
    %p81 = scmp.eq.s32.totalorder %s10, 1
    %p82 = scmp.ne.s32.totalorder %s77, %s79
    %p83 = scmp.eq.s32.totalorder %s10, 0
    %p84 = por %p82, %p83
    %p85 = scmp.ne.s32.totalorder %s77, %s79
    %p86 = scmp.eq.s32.totalorder %s15, 1
    %p87 = por %p85, %p86
    %p88 = scmp.ne.s32.totalorder %s79, %s80
    %p89 = scmp.eq.s32.totalorder %s15, 0
    %p90 = por %p88, %p89
    %p91 = scmp.ne.s32.totalorder %s79, %s80
    %p92 = scmp.eq.s32.totalorder %s16, 1
    %p93 = por %p91, %p92
    %p95 = scmp.ne.s32.totalorder %s80, %s94
    %p96 = scmp.eq.s32.totalorder %s16, 0
    %p97 = por %p95, %p96
    %s98 = ssub.s32 %s18, %s25
    %p99 = scmp.eq.s32.totalorder %s98, 0
    %s101 = sadd.s32 %s100, 1
    %s102 = scalar_select %p99, %s100, %s101
    %p105 = pneg %p99
    %p106 = scmp.eq.s32.totalorder %s10, 1
    %p107 = por %p105, %p106
    %p108 = scmp.ne.s32.totalorder %s100, %s103
    %p109 = scmp.eq.s32.totalorder %s10, 0
    %p110 = por %p108, %p109
    %p111 = scmp.ne.s32.totalorder %s100, %s103
    %p112 = scmp.eq.s32.totalorder %s15, 1
    %p113 = por %p111, %p112
    %p114 = scmp.ne.s32.totalorder %s103, %s104
    %p115 = scmp.eq.s32.totalorder %s15, 0
    %p116 = por %p114, %p115
    %p117 = scmp.ne.s32.totalorder %s103, %s104
    %p118 = scmp.eq.s32.totalorder %s16, 1
    %p119 = por %p117, %p118
    %p121 = scmp.ne.s32.totalorder %s104, %s120
    %p122 = scmp.eq.s32.totalorder %s16, 0
    %p123 = por %p121, %p122
    %s124 = ssub.s32 %s17, %s29
    %s125 = ssub.s32 %s18, %s25
    %s126 = sor.u32 %s124, %s125
    %p127 = scmp.eq.s32.totalorder %s126, 0
    %s129 = sadd.s32 %s128, 1
    %s130 = scalar_select %p127, %s128, %s129
    %p133 = pneg %p127
    %p134 = scmp.eq.s32.totalorder %s10, 1
    %p135 = por %p133, %p134
    %p136 = scmp.ne.s32.totalorder %s128, %s131
    %p137 = scmp.eq.s32.totalorder %s10, 0
    %p138 = por %p136, %p137
    %p139 = scmp.ne.s32.totalorder %s128, %s131
    %p140 = scmp.eq.s32.totalorder %s15, 1
    %p141 = por %p139, %p140
    %p142 = scmp.ne.s32.totalorder %s131, %s132
    %p143 = scmp.eq.s32.totalorder %s15, 0
    %p144 = por %p142, %p143
    %p145 = scmp.ne.s32.totalorder %s131, %s132
    %p146 = scmp.eq.s32.totalorder %s16, 1
    %p147 = por %p145, %p146
    %p149 = scmp.ne.s32.totalorder %s132, %s148
    %p150 = scmp.eq.s32.totalorder %s16, 0
    %p151 = por %p149, %p150
    %p152 = scmp.le.s32.totalorder 1, %s10
    %p153 = scmp.lt.s32.totalorder %s10, 3
    %p154 = pnand %p152, %p153
    %p155 = pneg %p154
    // Predicated region
    $region9: #{gpt_forward.5} parent=5 // pred_check
      _
    $region10: #{gpt_forward.5} parent=5 // pred_check_branch
      %157 = sbr.rel (%p154) target = $region12
    $region11: #{gpt_forward.5} parent=5 // pred_region
      %s158 = ssub.s32 %s10, 1
      // Predicated region
      $region13: #{gpt_forward.5} parent=11 // pred_check
        %p159 = pneg %p69
      $region14: #{gpt_forward.5} parent=11 // pred_check_branch
        %161 = sbr.rel (%p159) target = $region16
      $region15: #{gpt_forward.5} parent=11 // pred_region
        _
      $region16: #{gpt_forward.5} parent=11 // pred_fallthru
        _
      // Predicated region
      $region17: #{gpt_forward.5} parent=11 // pred_check
        %p162 = pneg %p90
      $region18: #{gpt_forward.5} parent=11 // pred_check_branch
        %164 = sbr.rel (%p162) target = $region20
      $region19: #{gpt_forward.5} parent=11 // pred_region
        _
      $region20: #{gpt_forward.5} parent=11 // pred_fallthru
        _
      // Predicated region
      $region21: #{gpt_forward.5} parent=11 // pred_check
        %p165 = pneg %p116
      $region22: #{gpt_forward.5} parent=11 // pred_check_branch
        %167 = sbr.rel (%p165) target = $region24
      $region23: #{gpt_forward.5} parent=11 // pred_region
        %p168 = scmp.lt.s32.totalorder %s20, 0
        %s169 = scalar_select %p168, %s20, 0
        %s170 = smul.addr %s169, 4
        %s171 = scalar_lea.vmem %s3, %s170
      $region24: #{gpt_forward.5} parent=11 // pred_fallthru
        _
    $region12: #{gpt_forward.5} parent=5 // pred_fallthru
      _
    %p172 = scmp.lt.s32.totalorder %s10, 2
    // Predicated region
    $region25: #{gpt_forward.5} parent=5 // pred_check
      %p173 = pneg %p172
    $region26: #{gpt_forward.5} parent=5 // pred_check_branch
      %175 = sbr.rel (%p173) target = $region28
    $region27: #{gpt_forward.5} parent=5 // pred_region
      // Predicated region
      $region29: #{gpt_forward.5} parent=27 // pred_check
        %p176 = pneg %p42
      $region30: #{gpt_forward.5} parent=27 // pred_check_branch
        %178 = sbr.rel (%p176) target = $region32
      $region31: #{gpt_forward.5} parent=27 // pred_region
        %p179 = scmp.lt.s32.totalorder %s17, 1
        %s180 = scalar_select %p179, %s17, 1
        %s181 = smul.addr %s180, 8
        %s182 = scalar_lea.vmem %s0, %s181
      $region32: #{gpt_forward.5} parent=27 // pred_fallthru
        _
    $region28: #{gpt_forward.5} parent=5 // pred_fallthru
      _
    %p183 = scmp.le.s32.totalorder 1, %s10
    %p184 = scmp.lt.s32.totalorder %s10, 3
    %p185 = pnand %p183, %p184
    %p186 = pneg %p185
    // Predicated region
    $region33: #{gpt_forward.5} parent=5 // pred_check
      _
    $region34: #{gpt_forward.5} parent=5 // pred_check_branch
      %188 = sbr.rel (%p185) target = $region36
    $region35: #{gpt_forward.5} parent=5 // pred_region
      %s189 = ssub.s32 %s10, 1
      %p190 = scmp.lt.s32.totalorder %s19, 1
      %s191 = scalar_select %p190, %s19, 1
      %s192 = smul.addr %s191, 8
      %s193 = scalar_lea.vmem %s0, %s192
      %p194 = pneg %p48
      %p195 = pneg %p45
      %p196 = pneg %p69
      %p197 = pneg %p66
      %p198 = pneg %p90
      %p199 = pneg %p87
      %p200 = scmp.lt.s32.totalorder %s20, 0
      %s201 = scalar_select %p200, %s20, 0
      %s202 = smul.addr %s201, 4
      %s203 = scalar_lea.vmem %s3, %s202
      %p204 = pneg %p116
      %p205 = pneg %p113
      %p206 = pneg %p144
      %p207 = pneg %p141
      %p208 = scmp.lt.s32.totalorder %s19, 1
      %s209 = scalar_select %p208, %s19, 1
      %p210 = scmp.lt.s32.totalorder %s20, 0
      %s211 = scalar_select %p210, %s20, 0
      %s212 = sadd.s32 %s211, %s209
      %s213 = smul.addr %s212, 8
      %s214 = scalar_lea.vmem %s4, %s213
      %p215 = scmp.lt.s32.totalorder %s19, 1
      %s216 = scalar_select %p215, %s19, 1
      %s217 = smul.addr %s216, 8
      %s218 = scalar_lea.vmem %s0, %s217
      %p219 = scmp.lt.s32.totalorder %s20, 0
      %s220 = scalar_select %p219, %s20, 0
      %s221 = smul.addr %s220, 4
      %s222 = scalar_lea.vmem %s3, %s221
      %p223 = scmp.lt.s32.totalorder %s19, 1
      %s224 = scalar_select %p223, %s19, 1
      %p225 = scmp.lt.s32.totalorder %s20, 0
      %s226 = scalar_select %p225, %s20, 0
      %s227 = sadd.s32 %s226, %s224
      %s228 = smul.addr %s227, 8
      %s229 = scalar_lea.vmem %s4, %s228
      %v231 = vld [vmem:[%s218] sm:$0xff]
      %v232 = vld [vmem:[%s1] sm:$0x1]
      %v233 = vld [vmem:[%s2] sm:$0x1]
      %vm234 = vcmask 261120
      %v235 = vsel %vm234, %v231, 0.0
      %236 = vadd.xlane.f32.xlu0 %v235
      %v237 = vpop.xlane.xlu0 %236
      %v238 = vrcp.pop 32.0
      %v239 = vmul.f32 %v237, %v238
      %v240 = vsub.f32 %v231, %v239
      %v241 = vmul.f32 %v240, %v240
      %v242 = vsel %vm234, %v241, 0.0
      %243 = vadd.xlane.f32.xlu0 %v242
      %v244 = vpop.xlane.xlu0 %243
      %v245 = vmul.f32 %v244, %v238
      %v246 = vadd.f32 %v245, 1e-05
      %v247 = vrsqrt.pop %v246
      %v248 = vmul.f32 %v240, %v247
      %v250 = vlaneseq
      %v251 = vshrl.u32 %v250, 7
      %v252 = vsub.s32 0, %v251
      %v253 = vrot.slane %v232, %v252
      %v255 = vmul.f32 %v248, %v253
      %v257 = vlaneseq
      %v258 = vshrl.u32 %v257, 7
      %v259 = vsub.s32 0, %v258
      %v260 = vrot.slane %v233, %v259
      %v262 = vadd.f32 %v255, %v260
      %v263 = vpack.c.bf16 %v262, %v262
      %v264 = vld [vmem:[%s222] sm:$0xf]
      %v265 = vld [vmem:[%s222 + $0x4] sm:$0xf]
      %v266 = vld [vmem:[%s222 + $0x8] sm:$0xf]
      %v267 = vld [vmem:[%s222 + $0xc] sm:$0xf]
      %v272 = vunpack.c.l.b16 %v264
      %v273 = vunpack.c.l.b16 %v265
      %v274 = vunpack.c.l.b16 %v266
      %v275 = vunpack.c.l.b16 %v267
      %v276 = vpack.c.b16 %v273, %v272
      %v277 = vpack.c.b16 %v275, %v274
      %v281 = vsel %vm234, %v263, 0
      %283 = vmatprep.subr.bf16.mxu0 0
      %284 = vmatpush1.bf16.msra.mxu0 %v276
      %285 = vmatprep.subr.bf16.mxu0 0
      %286 = vmatpush1.bf16.msra.mxu0 %v277
      %287 = vmatprep.subr.bf16.mxu0 0
      %288 = vmatpush1.bf16.msra.mxu0 0
      %289 = vmatprep.subr.bf16.mxu0 0
      %290 = vmatpush1.bf16.msra.mxu0 0
      %291 = vmatprep.subr.bf16.mxu0 0
      %292 = vmatpush1.bf16.msra.mxu0 0
      %293 = vmatprep.subr.bf16.mxu0 0
      %294 = vmatpush1.bf16.msra.mxu0 0
      %295 = vmatprep.subr.bf16.mxu0 0
      %296 = vmatpush1.bf16.msra.mxu0 0
      %297 = vmatprep.subr.bf16.mxu0 0
      %298 = vmatpush1.bf16.msra.mxu0 0
      %299 = vmatprep.subr.bf16.mxu0 0
      %300 = vmatpush1.bf16.msra.mxu0 0
      %301 = vmatprep.subr.bf16.mxu0 0
      %302 = vmatpush1.bf16.msra.mxu0 0
      %303 = vmatprep.subr.bf16.mxu0 0
      %304 = vmatpush1.bf16.msra.mxu0 0
      %305 = vmatprep.subr.bf16.mxu0 0
      %306 = vmatpush1.bf16.msra.mxu0 0
      %307 = vmatprep.subr.bf16.mxu0 0
      %308 = vmatpush1.bf16.msra.mxu0 0
      %309 = vmatprep.subr.bf16.mxu0 0
      %310 = vmatpush1.bf16.msra.mxu0 0
      %311 = vmatprep.subr.bf16.mxu0 0
      %312 = vmatpush1.bf16.msra.mxu0 0
      %313 = vmatprep.subr.bf16.mxu0 0
      %314 = vmatpush1.bf16.msra.mxu0 0
      %315 = vmatprep.mubr.bf16.mxu0 0
      %316 = vmatmul.mubr.bf16.gmra.mrb[0].mxu0 %v281
      %v317 = vpop.f32.mrb[0].mxu0
      %v318 = vadd.f32 0.0, %v317
      %v319 = vpop.f32.mrb[0].mxu0
      %v320 = vpop.f32.mrb[0].mxu0
      %v321 = vpop.f32.mrb[0].mxu0
      %322 = vdwg.mxu0
      %323 = vst [vmem:[%s229] sm:$0xff] %v318
      %p324 = scmp.lt.s32.totalorder %s19, 1
      %s325 = scalar_select %p324, %s19, 1
      %p326 = scmp.lt.s32.totalorder %s20, 0
      %s327 = scalar_select %p326, %s20, 0
      %s328 = sadd.s32 %s327, %s325
      %s329 = smul.addr %s328, 8
      %s330 = scalar_lea.vmem %s4, %s329
      // Predicated region
      $region37: #{gpt_forward.5} parent=35 // pred_check
        %p331 = pneg %p141
      $region38: #{gpt_forward.5} parent=35 // pred_check_branch
        %333 = sbr.rel (%p331) target = $region40
      $region39: #{gpt_forward.5} parent=35 // pred_region
        _
      $region40: #{gpt_forward.5} parent=35 // pred_fallthru
        _
    $region36: #{gpt_forward.5} parent=5 // pred_fallthru
      _
    %p334 = scmp.le.s32.totalorder 2, %s10
    // Predicated region
    $region41: #{gpt_forward.5} parent=5 // pred_check
      %p335 = pneg %p334
    $region42: #{gpt_forward.5} parent=5 // pred_check_branch
      %337 = sbr.rel (%p335) target = $region44
    $region43: #{gpt_forward.5} parent=5 // pred_region
      %s338 = ssub.s32 %s10, 2
      // Predicated region
      $region45: #{gpt_forward.5} parent=43 // pred_check
        %p339 = pneg %p147
      $region46: #{gpt_forward.5} parent=43 // pred_check_branch
        %341 = sbr.rel (%p339) target = $region48
      $region47: #{gpt_forward.5} parent=43 // pred_region
        %p342 = scmp.lt.s32.totalorder %s21, 1
        %s343 = scalar_select %p342, %s21, 1
        %p344 = scmp.lt.s32.totalorder %s22, 0
        %s345 = scalar_select %p344, %s22, 0
        %s346 = sadd.s32 %s345, %s343
        %s347 = smul.addr %s346, 8
        %s348 = scalar_lea.vmem %s4, %s347
      $region48: #{gpt_forward.5} parent=43 // pred_fallthru
        _
    $region44: #{gpt_forward.5} parent=5 // pred_fallthru
      _
  $region6: #{gpt_forward.5} parent=0 // loop_footer
    %s14 = sadd.s32 1, %s10
  $region7: #{gpt_forward.5} parent=0 // loop_footer_branch
    %9 = sbr.rel target = $region3
  $region8: #{gpt_forward.5} parent=0 // loop_exit
    _

// kernel: gpt_forward.4
$region0: #{gpt_forward.4}
  #allocation0 [shape = 'u32[]', space=smem, size = 0x4, offset = 0x4, fixed_abs, tag = 'smem constant byte address 0x4 - core index']
  #allocation1 [shape = 'u32[144,128]{1,0:T(1,128)}', space=vmem, size = 0x12000, scoped, tag = 'internal scratch']
  #allocation2 [shape = 'f32[8,32]{1,0:T(8,128)}', space=vmem, size = 0x1000, scoped, tag = 'scratch operand']
  %s0 = inlined_call_operand.vmem [shape: f32[16,32], index: 0, kind: input, shape index: {}]
  %s1 = inlined_call_operand.vmem [shape: f32[2,1,32], index: 1, kind: input, shape index: {}]
  %s2 = inlined_call_operand.vmem [shape: f32[2,1,32], index: 2, kind: input, shape index: {}]
  %s3 = inlined_call_operand.vmem [shape: bf16[2,32,96], index: 3, kind: input, shape index: {}]
  %s4 = inlined_call_operand.vmem [shape: f32[2,1,96], index: 4, kind: input, shape index: {}]
  %s5 = inlined_call_operand.vmem [shape: bf16[2,32,32], index: 5, kind: input, shape index: {}]
  %s6 = inlined_call_operand.vmem [shape: f32[2,1,32], index: 6, kind: input, shape index: {}]
  %s7 = inlined_call_operand.vmem [shape: f32[2,1,32], index: 7, kind: input, shape index: {}]
  %s8 = inlined_call_operand.vmem [shape: f32[2,1,32], index: 8, kind: input, shape index: {}]
  %s9 = inlined_call_operand.vmem [shape: bf16[2,32,128], index: 9, kind: input, shape index: {}]
  %s10 = inlined_call_operand.vmem [shape: f32[2,1,128], index: 10, kind: input, shape index: {}]
  %s11 = inlined_call_operand.vmem [shape: bf16[2,128,32], index: 11, kind: input, shape index: {}]
  %s12 = inlined_call_operand.vmem [shape: f32[2,1,32], index: 12, kind: input, shape index: {}]
  %s13 = inlined_call_operand.vmem [shape: f32[16,32], index: 13, kind: output, shape index: {}]
  %s14 = sld [smem:[#allocation0]]
  $region93: #{gpt_forward.4} parent=0
    _
  %s16 = ssub.s32 1, %s14
  %s17 = scalar_select 0, %s16, %s14
  loop: start=0, step=1, limit=6
  $region2: #{gpt_forward.4} parent=0 // loop_pre_header
    _
  $region3: #{gpt_forward.4} parent=0 // loop_header
    %s19 = sphi 0, %s23
    %p20 = scmp.ge.s32.totalorder %s19, 6
    %s26 = sphi 0, %s38
    %s27 = sphi 0, %s34
    %s28 = sphi 0, %s26
    %s29 = sphi 0, %s27
    %s30 = sphi 0, %s28
    %s31 = sphi 0, %s29
    %s41 = sphi 0, %s43
    %s44 = sphi 0, %s41
    %s45 = sphi 0, %s44
    %s61 = sphi 0, %s45
    %s67 = sphi 0, %s69
    %s70 = sphi 0, %s67
    %s71 = sphi 0, %s70
    %s87 = sphi 0, %s71
    %s93 = sphi 0, %s95
    %s96 = sphi 0, %s93
    %s97 = sphi 0, %s96
    %s113 = sphi 0, %s97
    %s119 = sphi 0, %s121
    %s122 = sphi 0, %s119
    %s123 = sphi 0, %s122
    %s139 = sphi 0, %s123
    %s145 = sphi 0, %s147
    %s148 = sphi 0, %s145
    %s149 = sphi 0, %s148
    %s165 = sphi 0, %s149
    %s171 = sphi 0, %s173
    %s174 = sphi 0, %s171
    %s175 = sphi 0, %s174
    %s191 = sphi 0, %s175
    %s197 = sphi 0, %s199
    %s200 = sphi 0, %s197
    %s201 = sphi 0, %s200
    %s217 = sphi 0, %s201
    %s223 = sphi 0, %s225
    %s226 = sphi 0, %s223
    %s227 = sphi 0, %s226
    %s243 = sphi 0, %s227
    %s249 = sphi 0, %s251
    %s252 = sphi 0, %s249
    %s253 = sphi 0, %s252
    %s269 = sphi 0, %s253
    %s275 = sphi 0, %s277
    %s278 = sphi 0, %s275
    %s279 = sphi 0, %s278
    %s295 = sphi 0, %s279
    %s301 = sphi 0, %s303
    %s304 = sphi 0, %s301
    %s305 = sphi 0, %s304
    %s321 = sphi 0, %s305
    %s327 = sphi 0, %s329
    %s330 = sphi 0, %s327
    %s331 = sphi 0, %s330
    %s347 = sphi 0, %s331
    %s353 = sphi 0, %s355
    %s356 = sphi 0, %s353
    %s357 = sphi 0, %s356
    %s373 = sphi 0, %s357
    %s379 = sphi 0, %s381
    %s382 = sphi 0, %s379
    %s383 = sphi 0, %s382
    %s399 = sphi 0, %s383
  $region4: #{gpt_forward.4} parent=0 // loop_header_branch
    %22 = sbr.rel (%p20) target = $region8
  $region5: #{gpt_forward.4} parent=0 // loop_body
    %s24 = ssub.s32 %s19, 1
    %s25 = ssub.s32 %s19, 2
    %s32 = sadd.s32 1, %s27
    %p33 = scmp.ge.s32.totalorder %s32, 2
    %s34 = scalar_select %p33, 0, %s32
    %s35 = sadd.s32 1, %s26
    %s36 = scalar_select %p33, %s35, %s26
    %p37 = scmp.ge.s32.totalorder %s36, 2
    %s38 = scalar_select %p37, 0, %s36
    %s39 = ssub.s32 %s26, %s38
    %p40 = scmp.eq.s32.totalorder %s39, 0
    %s42 = sadd.s32 %s41, 1
    %s43 = scalar_select %p40, %s41, %s42
    %p46 = pneg %p40
    %p47 = scmp.eq.s32.totalorder %s19, 3
    %p48 = por %p46, %p47
    %p49 = scmp.ne.s32.totalorder %s41, %s44
    %p50 = scmp.eq.s32.totalorder %s19, 0
    %p51 = por %p49, %p50
    %p52 = scmp.ne.s32.totalorder %s41, %s44
    %p53 = scmp.eq.s32.totalorder %s24, 3
    %p54 = por %p52, %p53
    %p55 = scmp.ne.s32.totalorder %s44, %s45
    %p56 = scmp.eq.s32.totalorder %s24, 0
    %p57 = por %p55, %p56
    %p58 = scmp.ne.s32.totalorder %s44, %s45
    %p59 = scmp.eq.s32.totalorder %s25, 3
    %p60 = por %p58, %p59
    %p62 = scmp.ne.s32.totalorder %s45, %s61
    %p63 = scmp.eq.s32.totalorder %s25, 0
    %p64 = por %p62, %p63
    %s65 = ssub.s32 %s27, %s34
    %p66 = scmp.eq.s32.totalorder %s65, 0
    %s68 = sadd.s32 %s67, 1
    %s69 = scalar_select %p66, %s67, %s68
    %p72 = pneg %p66
    %p73 = scmp.eq.s32.totalorder %s19, 3
    %p74 = por %p72, %p73
    %p75 = scmp.ne.s32.totalorder %s67, %s70
    %p76 = scmp.eq.s32.totalorder %s19, 0
    %p77 = por %p75, %p76
    %p78 = scmp.ne.s32.totalorder %s67, %s70
    %p79 = scmp.eq.s32.totalorder %s24, 3
    %p80 = por %p78, %p79
    %p81 = scmp.ne.s32.totalorder %s70, %s71
    %p82 = scmp.eq.s32.totalorder %s24, 0
    %p83 = por %p81, %p82
    %p84 = scmp.ne.s32.totalorder %s70, %s71
    %p85 = scmp.eq.s32.totalorder %s25, 3
    %p86 = por %p84, %p85
    %p88 = scmp.ne.s32.totalorder %s71, %s87
    %p89 = scmp.eq.s32.totalorder %s25, 0
    %p90 = por %p88, %p89
    %s91 = ssub.s32 %s27, %s34
    %p92 = scmp.eq.s32.totalorder %s91, 0
    %s94 = sadd.s32 %s93, 1
    %s95 = scalar_select %p92, %s93, %s94
    %p98 = pneg %p92
    %p99 = scmp.eq.s32.totalorder %s19, 3
    %p100 = por %p98, %p99
    %p101 = scmp.ne.s32.totalorder %s93, %s96
    %p102 = scmp.eq.s32.totalorder %s19, 0
    %p103 = por %p101, %p102
    %p104 = scmp.ne.s32.totalorder %s93, %s96
    %p105 = scmp.eq.s32.totalorder %s24, 3
    %p106 = por %p104, %p105
    %p107 = scmp.ne.s32.totalorder %s96, %s97
    %p108 = scmp.eq.s32.totalorder %s24, 0
    %p109 = por %p107, %p108
    %p110 = scmp.ne.s32.totalorder %s96, %s97
    %p111 = scmp.eq.s32.totalorder %s25, 3
    %p112 = por %p110, %p111
    %p114 = scmp.ne.s32.totalorder %s97, %s113
    %p115 = scmp.eq.s32.totalorder %s25, 0
    %p116 = por %p114, %p115
    %s117 = ssub.s32 %s27, %s34
    %p118 = scmp.eq.s32.totalorder %s117, 0
    %s120 = sadd.s32 %s119, 1
    %s121 = scalar_select %p118, %s119, %s120
    %p124 = pneg %p118
    %p125 = scmp.eq.s32.totalorder %s19, 3
    %p126 = por %p124, %p125
    %p127 = scmp.ne.s32.totalorder %s119, %s122
    %p128 = scmp.eq.s32.totalorder %s19, 0
    %p129 = por %p127, %p128
    %p130 = scmp.ne.s32.totalorder %s119, %s122
    %p131 = scmp.eq.s32.totalorder %s24, 3
    %p132 = por %p130, %p131
    %p133 = scmp.ne.s32.totalorder %s122, %s123
    %p134 = scmp.eq.s32.totalorder %s24, 0
    %p135 = por %p133, %p134
    %p136 = scmp.ne.s32.totalorder %s122, %s123
    %p137 = scmp.eq.s32.totalorder %s25, 3
    %p138 = por %p136, %p137
    %p140 = scmp.ne.s32.totalorder %s123, %s139
    %p141 = scmp.eq.s32.totalorder %s25, 0
    %p142 = por %p140, %p141
    %s143 = ssub.s32 %s27, %s34
    %p144 = scmp.eq.s32.totalorder %s143, 0
    %s146 = sadd.s32 %s145, 1
    %s147 = scalar_select %p144, %s145, %s146
    %p150 = pneg %p144
    %p151 = scmp.eq.s32.totalorder %s19, 3
    %p152 = por %p150, %p151
    %p153 = scmp.ne.s32.totalorder %s145, %s148
    %p154 = scmp.eq.s32.totalorder %s19, 0
    %p155 = por %p153, %p154
    %p156 = scmp.ne.s32.totalorder %s145, %s148
    %p157 = scmp.eq.s32.totalorder %s24, 3
    %p158 = por %p156, %p157
    %p159 = scmp.ne.s32.totalorder %s148, %s149
    %p160 = scmp.eq.s32.totalorder %s24, 0
    %p161 = por %p159, %p160
    %p162 = scmp.ne.s32.totalorder %s148, %s149
    %p163 = scmp.eq.s32.totalorder %s25, 3
    %p164 = por %p162, %p163
    %p166 = scmp.ne.s32.totalorder %s149, %s165
    %p167 = scmp.eq.s32.totalorder %s25, 0
    %p168 = por %p166, %p167
    %s169 = ssub.s32 %s27, %s34
    %p170 = scmp.eq.s32.totalorder %s169, 0
    %s172 = sadd.s32 %s171, 1
    %s173 = scalar_select %p170, %s171, %s172
    %p176 = pneg %p170
    %p177 = scmp.eq.s32.totalorder %s19, 3
    %p178 = por %p176, %p177
    %p179 = scmp.ne.s32.totalorder %s171, %s174
    %p180 = scmp.eq.s32.totalorder %s19, 0
    %p181 = por %p179, %p180
    %p182 = scmp.ne.s32.totalorder %s171, %s174
    %p183 = scmp.eq.s32.totalorder %s24, 3
    %p184 = por %p182, %p183
    %p185 = scmp.ne.s32.totalorder %s174, %s175
    %p186 = scmp.eq.s32.totalorder %s24, 0
    %p187 = por %p185, %p186
    %p188 = scmp.ne.s32.totalorder %s174, %s175
    %p189 = scmp.eq.s32.totalorder %s25, 3
    %p190 = por %p188, %p189
    %p192 = scmp.ne.s32.totalorder %s175, %s191
    %p193 = scmp.eq.s32.totalorder %s25, 0
    %p194 = por %p192, %p193
    %s195 = ssub.s32 %s27, %s34
    %p196 = scmp.eq.s32.totalorder %s195, 0
    %s198 = sadd.s32 %s197, 1
    %s199 = scalar_select %p196, %s197, %s198
    %p202 = pneg %p196
    %p203 = scmp.eq.s32.totalorder %s19, 3
    %p204 = por %p202, %p203
    %p205 = scmp.ne.s32.totalorder %s197, %s200
    %p206 = scmp.eq.s32.totalorder %s19, 0
    %p207 = por %p205, %p206
    %p208 = scmp.ne.s32.totalorder %s197, %s200
    %p209 = scmp.eq.s32.totalorder %s24, 3
    %p210 = por %p208, %p209
    %p211 = scmp.ne.s32.totalorder %s200, %s201
    %p212 = scmp.eq.s32.totalorder %s24, 0
    %p213 = por %p211, %p212
    %p214 = scmp.ne.s32.totalorder %s200, %s201
    %p215 = scmp.eq.s32.totalorder %s25, 3
    %p216 = por %p214, %p215
    %p218 = scmp.ne.s32.totalorder %s201, %s217
    %p219 = scmp.eq.s32.totalorder %s25, 0
    %p220 = por %p218, %p219
    %s221 = ssub.s32 %s27, %s34
    %p222 = scmp.eq.s32.totalorder %s221, 0
    %s224 = sadd.s32 %s223, 1
    %s225 = scalar_select %p222, %s223, %s224
    %p228 = pneg %p222
    %p229 = scmp.eq.s32.totalorder %s19, 3
    %p230 = por %p228, %p229
    %p231 = scmp.ne.s32.totalorder %s223, %s226
    %p232 = scmp.eq.s32.totalorder %s19, 0
    %p233 = por %p231, %p232
    %p234 = scmp.ne.s32.totalorder %s223, %s226
    %p235 = scmp.eq.s32.totalorder %s24, 3
    %p236 = por %p234, %p235
    %p237 = scmp.ne.s32.totalorder %s226, %s227
    %p238 = scmp.eq.s32.totalorder %s24, 0
    %p239 = por %p237, %p238
    %p240 = scmp.ne.s32.totalorder %s226, %s227
    %p241 = scmp.eq.s32.totalorder %s25, 3
    %p242 = por %p240, %p241
    %p244 = scmp.ne.s32.totalorder %s227, %s243
    %p245 = scmp.eq.s32.totalorder %s25, 0
    %p246 = por %p244, %p245
    %s247 = ssub.s32 %s27, %s34
    %p248 = scmp.eq.s32.totalorder %s247, 0
    %s250 = sadd.s32 %s249, 1
    %s251 = scalar_select %p248, %s249, %s250
    %p254 = pneg %p248
    %p255 = scmp.eq.s32.totalorder %s19, 3
    %p256 = por %p254, %p255
    %p257 = scmp.ne.s32.totalorder %s249, %s252
    %p258 = scmp.eq.s32.totalorder %s19, 0
    %p259 = por %p257, %p258
    %p260 = scmp.ne.s32.totalorder %s249, %s252
    %p261 = scmp.eq.s32.totalorder %s24, 3
    %p262 = por %p260, %p261
    %p263 = scmp.ne.s32.totalorder %s252, %s253
    %p264 = scmp.eq.s32.totalorder %s24, 0
    %p265 = por %p263, %p264
    %p266 = scmp.ne.s32.totalorder %s252, %s253
    %p267 = scmp.eq.s32.totalorder %s25, 3
    %p268 = por %p266, %p267
    %p270 = scmp.ne.s32.totalorder %s253, %s269
    %p271 = scmp.eq.s32.totalorder %s25, 0
    %p272 = por %p270, %p271
    %s273 = ssub.s32 %s27, %s34
    %p274 = scmp.eq.s32.totalorder %s273, 0
    %s276 = sadd.s32 %s275, 1
    %s277 = scalar_select %p274, %s275, %s276
    %p280 = pneg %p274
    %p281 = scmp.eq.s32.totalorder %s19, 3
    %p282 = por %p280, %p281
    %p283 = scmp.ne.s32.totalorder %s275, %s278
    %p284 = scmp.eq.s32.totalorder %s19, 0
    %p285 = por %p283, %p284
    %p286 = scmp.ne.s32.totalorder %s275, %s278
    %p287 = scmp.eq.s32.totalorder %s24, 3
    %p288 = por %p286, %p287
    %p289 = scmp.ne.s32.totalorder %s278, %s279
    %p290 = scmp.eq.s32.totalorder %s24, 0
    %p291 = por %p289, %p290
    %p292 = scmp.ne.s32.totalorder %s278, %s279
    %p293 = scmp.eq.s32.totalorder %s25, 3
    %p294 = por %p292, %p293
    %p296 = scmp.ne.s32.totalorder %s279, %s295
    %p297 = scmp.eq.s32.totalorder %s25, 0
    %p298 = por %p296, %p297
    %s299 = ssub.s32 %s27, %s34
    %p300 = scmp.eq.s32.totalorder %s299, 0
    %s302 = sadd.s32 %s301, 1
    %s303 = scalar_select %p300, %s301, %s302
    %p306 = pneg %p300
    %p307 = scmp.eq.s32.totalorder %s19, 3
    %p308 = por %p306, %p307
    %p309 = scmp.ne.s32.totalorder %s301, %s304
    %p310 = scmp.eq.s32.totalorder %s19, 0
    %p311 = por %p309, %p310
    %p312 = scmp.ne.s32.totalorder %s301, %s304
    %p313 = scmp.eq.s32.totalorder %s24, 3
    %p314 = por %p312, %p313
    %p315 = scmp.ne.s32.totalorder %s304, %s305
    %p316 = scmp.eq.s32.totalorder %s24, 0
    %p317 = por %p315, %p316
    %p318 = scmp.ne.s32.totalorder %s304, %s305
    %p319 = scmp.eq.s32.totalorder %s25, 3
    %p320 = por %p318, %p319
    %p322 = scmp.ne.s32.totalorder %s305, %s321
    %p323 = scmp.eq.s32.totalorder %s25, 0
    %p324 = por %p322, %p323
    %s325 = ssub.s32 %s27, %s34
    %p326 = scmp.eq.s32.totalorder %s325, 0
    %s328 = sadd.s32 %s327, 1
    %s329 = scalar_select %p326, %s327, %s328
    %p332 = pneg %p326
    %p333 = scmp.eq.s32.totalorder %s19, 3
    %p334 = por %p332, %p333
    %p335 = scmp.ne.s32.totalorder %s327, %s330
    %p336 = scmp.eq.s32.totalorder %s19, 0
    %p337 = por %p335, %p336
    %p338 = scmp.ne.s32.totalorder %s327, %s330
    %p339 = scmp.eq.s32.totalorder %s24, 3
    %p340 = por %p338, %p339
    %p341 = scmp.ne.s32.totalorder %s330, %s331
    %p342 = scmp.eq.s32.totalorder %s24, 0
    %p343 = por %p341, %p342
    %p344 = scmp.ne.s32.totalorder %s330, %s331
    %p345 = scmp.eq.s32.totalorder %s25, 3
    %p346 = por %p344, %p345
    %p348 = scmp.ne.s32.totalorder %s331, %s347
    %p349 = scmp.eq.s32.totalorder %s25, 0
    %p350 = por %p348, %p349
    %s351 = ssub.s32 %s27, %s34
    %p352 = scmp.eq.s32.totalorder %s351, 0
    %s354 = sadd.s32 %s353, 1
    %s355 = scalar_select %p352, %s353, %s354
    %p358 = pneg %p352
    %p359 = scmp.eq.s32.totalorder %s19, 3
    %p360 = por %p358, %p359
    %p361 = scmp.ne.s32.totalorder %s353, %s356
    %p362 = scmp.eq.s32.totalorder %s19, 0
    %p363 = por %p361, %p362
    %p364 = scmp.ne.s32.totalorder %s353, %s356
    %p365 = scmp.eq.s32.totalorder %s24, 3
    %p366 = por %p364, %p365
    %p367 = scmp.ne.s32.totalorder %s356, %s357
    %p368 = scmp.eq.s32.totalorder %s24, 0
    %p369 = por %p367, %p368
    %p370 = scmp.ne.s32.totalorder %s356, %s357
    %p371 = scmp.eq.s32.totalorder %s25, 3
    %p372 = por %p370, %p371
    %p374 = scmp.ne.s32.totalorder %s357, %s373
    %p375 = scmp.eq.s32.totalorder %s25, 0
    %p376 = por %p374, %p375
    %s377 = ssub.s32 %s26, %s38
    %p378 = scmp.eq.s32.totalorder %s377, 0
    %s380 = sadd.s32 %s379, 1
    %s381 = scalar_select %p378, %s379, %s380
    %p384 = pneg %p378
    %p385 = scmp.eq.s32.totalorder %s19, 3
    %p386 = por %p384, %p385
    %p387 = scmp.ne.s32.totalorder %s379, %s382
    %p388 = scmp.eq.s32.totalorder %s19, 0
    %p389 = por %p387, %p388
    %p390 = scmp.ne.s32.totalorder %s379, %s382
    %p391 = scmp.eq.s32.totalorder %s24, 3
    %p392 = por %p390, %p391
    %p393 = scmp.ne.s32.totalorder %s382, %s383
    %p394 = scmp.eq.s32.totalorder %s24, 0
    %p395 = por %p393, %p394
    %p396 = scmp.ne.s32.totalorder %s382, %s383
    %p397 = scmp.eq.s32.totalorder %s25, 3
    %p398 = por %p396, %p397
    %p400 = scmp.ne.s32.totalorder %s383, %s399
    %p401 = scmp.eq.s32.totalorder %s25, 0
    %p402 = por %p400, %p401
    %p403 = scmp.le.s32.totalorder 1, %s19
    %p404 = scmp.lt.s32.totalorder %s19, 5
    %p405 = pnand %p403, %p404
    %p406 = pneg %p405
    // Predicated region
    $region9: #{gpt_forward.4} parent=5 // pred_check
      _
    $region10: #{gpt_forward.4} parent=5 // pred_check_branch
      %408 = sbr.rel (%p405) target = $region12
    $region11: #{gpt_forward.4} parent=5 // pred_region
      %s409 = ssub.s32 %s19, 1
    $region12: #{gpt_forward.4} parent=5 // pred_fallthru
      _
    %p410 = scmp.lt.s32.totalorder %s19, 4
    // Predicated region
    $region13: #{gpt_forward.4} parent=5 // pred_check
      %p411 = pneg %p410
    $region14: #{gpt_forward.4} parent=5 // pred_check_branch
      %413 = sbr.rel (%p411) target = $region16
    $region15: #{gpt_forward.4} parent=5 // pred_region
      // Predicated region
      $region17: #{gpt_forward.4} parent=15 // pred_check
        %p414 = pneg %p51
      $region18: #{gpt_forward.4} parent=15 // pred_check_branch
        %416 = sbr.rel (%p414) target = $region20
      $region19: #{gpt_forward.4} parent=15 // pred_region
        %p417 = scmp.lt.s32.totalorder %s26, 1
        %s418 = scalar_select %p417, %s26, 1
        %s419 = smul.addr %s418, 8
        %s420 = scalar_lea.vmem %s0, %s419
      $region20: #{gpt_forward.4} parent=15 // pred_fallthru
        _
      // Predicated region
      $region21: #{gpt_forward.4} parent=15 // pred_check
        %p421 = pneg %p77
      $region22: #{gpt_forward.4} parent=15 // pred_check_branch
        %423 = sbr.rel (%p421) target = $region24
      $region23: #{gpt_forward.4} parent=15 // pred_region
        %p424 = scmp.lt.s32.totalorder %s27, 1
        %s425 = scalar_select %p424, %s27, 1
        %s426 = scalar_lea.vmem %s1, %s425
      $region24: #{gpt_forward.4} parent=15 // pred_fallthru
        _
      // Predicated region
      $region25: #{gpt_forward.4} parent=15 // pred_check
        %p427 = pneg %p103
      $region26: #{gpt_forward.4} parent=15 // pred_check_branch
        %429 = sbr.rel (%p427) target = $region28
      $region27: #{gpt_forward.4} parent=15 // pred_region
        %p430 = scmp.lt.s32.totalorder %s27, 1
        %s431 = scalar_select %p430, %s27, 1
        %s432 = scalar_lea.vmem %s2, %s431
      $region28: #{gpt_forward.4} parent=15 // pred_fallthru
        _
      // Predicated region
      $region29: #{gpt_forward.4} parent=15 // pred_check
        %p433 = pneg %p129
      $region30: #{gpt_forward.4} parent=15 // pred_check_branch
        %435 = sbr.rel (%p433) target = $region32
      $region31: #{gpt_forward.4} parent=15 // pred_region
        %p436 = scmp.lt.s32.totalorder %s27, 1
        %s437 = scalar_select %p436, %s27, 1
        %s438 = smul.addr %s437, 4
        %s439 = smul.addr %s438, 4
        %s440 = scalar_lea.vmem %s3, %s439
      $region32: #{gpt_forward.4} parent=15 // pred_fallthru
        _
      // Predicated region
      $region33: #{gpt_forward.4} parent=15 // pred_check
        %p441 = pneg %p155
      $region34: #{gpt_forward.4} parent=15 // pred_check_branch
        %443 = sbr.rel (%p441) target = $region36
      $region35: #{gpt_forward.4} parent=15 // pred_region
        %p444 = scmp.lt.s32.totalorder %s27, 1
        %s445 = scalar_select %p444, %s27, 1
        %s446 = scalar_lea.vmem %s4, %s445
      $region36: #{gpt_forward.4} parent=15 // pred_fallthru
        _
      // Predicated region
      $region37: #{gpt_forward.4} parent=15 // pred_check
        %p447 = pneg %p181
      $region38: #{gpt_forward.4} parent=15 // pred_check_branch
        %449 = sbr.rel (%p447) target = $region40
      $region39: #{gpt_forward.4} parent=15 // pred_region
        %p450 = scmp.lt.s32.totalorder %s27, 1
        %s451 = scalar_select %p450, %s27, 1
        %s452 = smul.addr %s451, 4
        %s453 = smul.addr %s452, 4
        %s454 = scalar_lea.vmem %s5, %s453
      $region40: #{gpt_forward.4} parent=15 // pred_fallthru
        _
      // Predicated region
      $region41: #{gpt_forward.4} parent=15 // pred_check
        %p455 = pneg %p207
      $region42: #{gpt_forward.4} parent=15 // pred_check_branch
        %457 = sbr.rel (%p455) target = $region44
      $region43: #{gpt_forward.4} parent=15 // pred_region
        %p458 = scmp.lt.s32.totalorder %s27, 1
        %s459 = scalar_select %p458, %s27, 1
        %s460 = scalar_lea.vmem %s6, %s459
      $region44: #{gpt_forward.4} parent=15 // pred_fallthru
        _
      // Predicated region
      $region45: #{gpt_forward.4} parent=15 // pred_check
        %p461 = pneg %p233
      $region46: #{gpt_forward.4} parent=15 // pred_check_branch
        %463 = sbr.rel (%p461) target = $region48
      $region47: #{gpt_forward.4} parent=15 // pred_region
        %p464 = scmp.lt.s32.totalorder %s27, 1
        %s465 = scalar_select %p464, %s27, 1
        %s466 = scalar_lea.vmem %s7, %s465
      $region48: #{gpt_forward.4} parent=15 // pred_fallthru
        _
      // Predicated region
      $region49: #{gpt_forward.4} parent=15 // pred_check
        %p467 = pneg %p259
      $region50: #{gpt_forward.4} parent=15 // pred_check_branch
        %469 = sbr.rel (%p467) target = $region52
      $region51: #{gpt_forward.4} parent=15 // pred_region
        %p470 = scmp.lt.s32.totalorder %s27, 1
        %s471 = scalar_select %p470, %s27, 1
        %s472 = scalar_lea.vmem %s8, %s471
      $region52: #{gpt_forward.4} parent=15 // pred_fallthru
        _
      // Predicated region
      $region53: #{gpt_forward.4} parent=15 // pred_check
        %p473 = pneg %p285
      $region54: #{gpt_forward.4} parent=15 // pred_check_branch
        %475 = sbr.rel (%p473) target = $region56
      $region55: #{gpt_forward.4} parent=15 // pred_region
        %p476 = scmp.lt.s32.totalorder %s27, 1
        %s477 = scalar_select %p476, %s27, 1
        %s478 = smul.addr %s477, 4
        %s479 = smul.addr %s478, 4
        %s480 = scalar_lea.vmem %s9, %s479
      $region56: #{gpt_forward.4} parent=15 // pred_fallthru
        _
      // Predicated region
      $region57: #{gpt_forward.4} parent=15 // pred_check
        %p481 = pneg %p311
      $region58: #{gpt_forward.4} parent=15 // pred_check_branch
        %483 = sbr.rel (%p481) target = $region60
      $region59: #{gpt_forward.4} parent=15 // pred_region
        %p484 = scmp.lt.s32.totalorder %s27, 1
        %s485 = scalar_select %p484, %s27, 1
        %s486 = scalar_lea.vmem %s10, %s485
      $region60: #{gpt_forward.4} parent=15 // pred_fallthru
        _
      // Predicated region
      $region61: #{gpt_forward.4} parent=15 // pred_check
        %p487 = pneg %p337
      $region62: #{gpt_forward.4} parent=15 // pred_check_branch
        %489 = sbr.rel (%p487) target = $region64
      $region63: #{gpt_forward.4} parent=15 // pred_region
        %p490 = scmp.lt.s32.totalorder %s27, 1
        %s491 = scalar_select %p490, %s27, 1
        %s492 = smul.addr %s491, 16
        %s493 = smul.addr %s492, 4
        %s494 = scalar_lea.vmem %s11, %s493
      $region64: #{gpt_forward.4} parent=15 // pred_fallthru
        _
      // Predicated region
      $region65: #{gpt_forward.4} parent=15 // pred_check
        %p495 = pneg %p363
      $region66: #{gpt_forward.4} parent=15 // pred_check_branch
        %497 = sbr.rel (%p495) target = $region68
      $region67: #{gpt_forward.4} parent=15 // pred_region
        %p498 = scmp.lt.s32.totalorder %s27, 1
        %s499 = scalar_select %p498, %s27, 1
        %s500 = scalar_lea.vmem %s12, %s499
      $region68: #{gpt_forward.4} parent=15 // pred_fallthru
        _
    $region16: #{gpt_forward.4} parent=5 // pred_fallthru
      _
    %p501 = scmp.le.s32.totalorder 1, %s19
    %p502 = scmp.lt.s32.totalorder %s19, 5
    %p503 = pnand %p501, %p502
    %p504 = pneg %p503
    // Predicated region
    $region69: #{gpt_forward.4} parent=5 // pred_check
      _
    $region70: #{gpt_forward.4} parent=5 // pred_check_branch
      %506 = sbr.rel (%p503) target = $region72
    $region71: #{gpt_forward.4} parent=5 // pred_region
      %s507 = ssub.s32 %s19, 1
      %p508 = scmp.lt.s32.totalorder %s28, 1
      %s509 = scalar_select %p508, %s28, 1
      %s510 = smul.addr %s509, 8
      %s511 = scalar_lea.vmem %s0, %s510
      %p512 = pneg %p57
      %p513 = pneg %p54
      %p514 = scmp.lt.s32.totalorder %s29, 1
      %s515 = scalar_select %p514, %s29, 1
      %s516 = scalar_lea.vmem %s1, %s515
      %p517 = pneg %p83
      %p518 = pneg %p80
      %p519 = scmp.lt.s32.totalorder %s29, 1
      %s520 = scalar_select %p519, %s29, 1
      %s521 = scalar_lea.vmem %s2, %s520
      %p522 = pneg %p109
      %p523 = pneg %p106
      %p524 = scmp.lt.s32.totalorder %s29, 1
      %s525 = scalar_select %p524, %s29, 1
      %s526 = smul.addr %s525, 4
      %s527 = smul.addr %s526, 4
      %s528 = scalar_lea.vmem %s3, %s527
      %p529 = pneg %p135
      %p530 = pneg %p132
      %p531 = scmp.lt.s32.totalorder %s29, 1
      %s532 = scalar_select %p531, %s29, 1
      %s533 = scalar_lea.vmem %s4, %s532
      %p534 = pneg %p161
      %p535 = pneg %p158
      %p536 = scmp.lt.s32.totalorder %s29, 1
      %s537 = scalar_select %p536, %s29, 1
      %s538 = smul.addr %s537, 4
      %s539 = smul.addr %s538, 4
      %s540 = scalar_lea.vmem %s5, %s539
      %p541 = pneg %p187
      %p542 = pneg %p184
      %p543 = scmp.lt.s32.totalorder %s29, 1
      %s544 = scalar_select %p543, %s29, 1
      %s545 = scalar_lea.vmem %s6, %s544
      %p546 = pneg %p213
      %p547 = pneg %p210
      %p548 = scmp.lt.s32.totalorder %s29, 1
      %s549 = scalar_select %p548, %s29, 1
      %s550 = scalar_lea.vmem %s7, %s549
      %p551 = pneg %p239
      %p552 = pneg %p236
      %p553 = scmp.lt.s32.totalorder %s29, 1
      %s554 = scalar_select %p553, %s29, 1
      %s555 = scalar_lea.vmem %s8, %s554
      %p556 = pneg %p265
      %p557 = pneg %p262
      %p558 = scmp.lt.s32.totalorder %s29, 1
      %s559 = scalar_select %p558, %s29, 1
      %s560 = smul.addr %s559, 4
      %s561 = smul.addr %s560, 4
      %s562 = scalar_lea.vmem %s9, %s561
      %p563 = pneg %p291
      %p564 = pneg %p288
      %p565 = scmp.lt.s32.totalorder %s29, 1
      %s566 = scalar_select %p565, %s29, 1
      %s567 = scalar_lea.vmem %s10, %s566
      %p568 = pneg %p317
      %p569 = pneg %p314
      %p570 = scmp.lt.s32.totalorder %s29, 1
      %s571 = scalar_select %p570, %s29, 1
      %s572 = smul.addr %s571, 16
      %s573 = smul.addr %s572, 4
      %s574 = scalar_lea.vmem %s11, %s573
      %p575 = pneg %p343
      %p576 = pneg %p340
      %p577 = scmp.lt.s32.totalorder %s29, 1
      %s578 = scalar_select %p577, %s29, 1
      %s579 = scalar_lea.vmem %s12, %s578
      %p580 = pneg %p369
      %p581 = pneg %p366
      %p582 = pneg %p395
      %p583 = pneg %p392
      %p584 = scmp.lt.s32.totalorder %s28, 1
      %s585 = scalar_select %p584, %s28, 1
      %s586 = smul.addr %s585, 8
      %s587 = scalar_lea.vmem %s13, %s586
      %p588 = scmp.lt.s32.totalorder %s28, 1
      %s589 = scalar_select %p588, %s28, 1
      %s590 = smul.addr %s589, 8
      %s591 = scalar_lea.vmem %s0, %s590
      %p592 = scmp.lt.s32.totalorder %s29, 1
      %s593 = scalar_select %p592, %s29, 1
      %s594 = scalar_lea.vmem %s1, %s593
      %p595 = scmp.lt.s32.totalorder %s29, 1
      %s596 = scalar_select %p595, %s29, 1
      %s597 = scalar_lea.vmem %s2, %s596
      %p598 = scmp.lt.s32.totalorder %s29, 1
      %s599 = scalar_select %p598, %s29, 1
      %s600 = smul.addr %s599, 4
      %s601 = smul.addr %s600, 4
      %s602 = scalar_lea.vmem %s3, %s601
      %p603 = scmp.lt.s32.totalorder %s29, 1
      %s604 = scalar_select %p603, %s29, 1
      %s605 = scalar_lea.vmem %s4, %s604
      %p606 = scmp.lt.s32.totalorder %s29, 1
      %s607 = scalar_select %p606, %s29, 1
      %s608 = smul.addr %s607, 4
      %s609 = smul.addr %s608, 4
      %s610 = scalar_lea.vmem %s5, %s609
      %p611 = scmp.lt.s32.totalorder %s29, 1
      %s612 = scalar_select %p611, %s29, 1
      %s613 = scalar_lea.vmem %s6, %s612
      %p614 = scmp.lt.s32.totalorder %s29, 1
      %s615 = scalar_select %p614, %s29, 1
      %s616 = scalar_lea.vmem %s7, %s615
      %p617 = scmp.lt.s32.totalorder %s29, 1
      %s618 = scalar_select %p617, %s29, 1
      %s619 = scalar_lea.vmem %s8, %s618
      %p620 = scmp.lt.s32.totalorder %s29, 1
      %s621 = scalar_select %p620, %s29, 1
      %s622 = smul.addr %s621, 4
      %s623 = smul.addr %s622, 4
      %s624 = scalar_lea.vmem %s9, %s623
      %p625 = scmp.lt.s32.totalorder %s29, 1
      %s626 = scalar_select %p625, %s29, 1
      %s627 = scalar_lea.vmem %s10, %s626
      %p628 = scmp.lt.s32.totalorder %s29, 1
      %s629 = scalar_select %p628, %s29, 1
      %s630 = smul.addr %s629, 16
      %s631 = smul.addr %s630, 4
      %s632 = scalar_lea.vmem %s11, %s631
      %p633 = scmp.lt.s32.totalorder %s29, 1
      %s634 = scalar_select %p633, %s29, 1
      %s635 = scalar_lea.vmem %s12, %s634
      %p636 = scmp.lt.s32.totalorder %s28, 1
      %s637 = scalar_select %p636, %s28, 1
      %s638 = smul.addr %s637, 8
      %s639 = scalar_lea.vmem %s13, %s638
      %p641 = scmp.eq.s32.totalorder %s29, 0
      // Predicated region
      $region73: #{gpt_forward.4} parent=71 // pred_check
        %p642 = pneg %p641
      $region74: #{gpt_forward.4} parent=71 // pred_check_branch
        %644 = sbr.rel (%p642) target = $region76
      $region75: #{gpt_forward.4} parent=71 // pred_region
        %v645 = vld [vmem:[%s591] sm:$0xff]
        %vm646 = vcmask 261120
        %647 = vst.msk [vmem:[#allocation2] sm:$0xff] %vm646, %v645
      $region76: #{gpt_forward.4} parent=71 // pred_fallthru
        _
      %v648 = vld [vmem:[#allocation2] sm:$0xff]
      %v649 = vld [vmem:[%s594] sm:$0x1]
      %v650 = vld [vmem:[%s597] sm:$0x1]
      %vm651 = vcmask 261120
      %v652 = vsel %vm651, %v648, 0.0
      %653 = vadd.xlane.f32.xlu0 %v652
      %v654 = vpop.xlane.xlu0 %653
      %v655 = vrcp.pop 32.0
      %v656 = vmul.f32 %v654, %v655
      %v657 = vsub.f32 %v648, %v656
      %v658 = vmul.f32 %v657, %v657
      %v659 = vsel %vm651, %v658, 0.0
      %660 = vadd.xlane.f32.xlu0 %v659
      %v661 = vpop.xlane.xlu0 %660
      %v662 = vmul.f32 %v661, %v655
      %v663 = vadd.f32 %v662, 1e-05
      %v664 = vrsqrt.pop %v663
      %v665 = vmul.f32 %v657, %v664
      %v667 = vlaneseq
      %v668 = vshrl.u32 %v667, 7
      %v669 = vsub.s32 0, %v668
      %v670 = vrot.slane %v649, %v669
      %v672 = vmul.f32 %v665, %v670
      %v674 = vlaneseq
      %v675 = vshrl.u32 %v674, 7
      %v676 = vsub.s32 0, %v675
      %v677 = vrot.slane %v650, %v676
      %v679 = vadd.f32 %v672, %v677
      %v680 = vpack.c.bf16 %v679, %v679
      %v681 = vld [vmem:[%s602] sm:$0xf]
      %v682 = vld [vmem:[%s602 + $0x4] sm:$0xf]
      %v683 = vld [vmem:[%s602 + $0x8] sm:$0xf]
      %v684 = vld [vmem:[%s602 + $0xc] sm:$0xf]
      %v685 = vld [vmem:[%s605] sm:$0x1]
      %v687 = vlaneseq
      %v688 = vshrl.u32 %v687, 7
      %v689 = vsub.s32 0, %v688
      %v690 = vrot.slane %v685, %v689
      %v696 = vunpack.c.l.b16 %v681
      %v697 = vunpack.c.l.b16 %v682
      %v698 = vunpack.c.l.b16 %v683
      %v699 = vunpack.c.l.b16 %v684
      %v700 = vpack.c.b16 %v697, %v696
      %v701 = vpack.c.b16 %v699, %v698
      %v705 = vsel %vm651, %v680, 0
      %707 = vmatprep.subr.bf16.mxu0 0
      %708 = vmatpush1.bf16.msra.mxu0 %v700
      %709 = vmatprep.subr.bf16.mxu0 0
      %710 = vmatpush1.bf16.msra.mxu0 %v701
      %711 = vmatprep.subr.bf16.mxu0 0
      %712 = vmatpush1.bf16.msra.mxu0 0
      %713 = vmatprep.subr.bf16.mxu0 0
      %714 = vmatpush1.bf16.msra.mxu0 0
      %715 = vmatprep.subr.bf16.mxu0 0
      %716 = vmatpush1.bf16.msra.mxu0 0
      %717 = vmatprep.subr.bf16.mxu0 0
      %718 = vmatpush1.bf16.msra.mxu0 0
      %719 = vmatprep.subr.bf16.mxu0 0
      %720 = vmatpush1.bf16.msra.mxu0 0
      %721 = vmatprep.subr.bf16.mxu0 0
      %722 = vmatpush1.bf16.msra.mxu0 0
      %723 = vmatprep.subr.bf16.mxu0 0
      %724 = vmatpush1.bf16.msra.mxu0 0
      %725 = vmatprep.subr.bf16.mxu0 0
      %726 = vmatpush1.bf16.msra.mxu0 0
      %727 = vmatprep.subr.bf16.mxu0 0
      %728 = vmatpush1.bf16.msra.mxu0 0
      %729 = vmatprep.subr.bf16.mxu0 0
      %730 = vmatpush1.bf16.msra.mxu0 0
      %731 = vmatprep.subr.bf16.mxu0 0
      %732 = vmatpush1.bf16.msra.mxu0 0
      %733 = vmatprep.subr.bf16.mxu0 0
      %734 = vmatpush1.bf16.msra.mxu0 0
      %735 = vmatprep.subr.bf16.mxu0 0
      %736 = vmatpush1.bf16.msra.mxu0 0
      %737 = vmatprep.subr.bf16.mxu0 0
      %738 = vmatpush1.bf16.msra.mxu0 0
      %739 = vmatprep.mubr.bf16.mxu0 0
      %740 = vmatmul.mubr.bf16.gmra.mrb[0].mxu0 %v705
      %v741 = vpop.f32.mrb[0].mxu0
      %v742 = vadd.f32 %v690, %v741
      %v743 = vpop.f32.mrb[0].mxu0
      %v744 = vpop.f32.mrb[0].mxu0
      %v745 = vpop.f32.mrb[0].mxu0
      %746 = vdwg.mxu0
      %v747 = vlaneseq
      %v748 = vshrl.u32 %v747, 7
      %v749 = vlaneseq
      %v750 = vand.u32 %v749, 127
      %vm751 = vcmp.ge.s32.totalorder %v748, %v750
      %v752 = vpack.c.bf16 %v742, %v742
      %754 = vrot.lane.b32.xlu0 %v752, 96
      %v755 = vpop.permute.xlu0 %754
      %vm756 = vcmask 64512
      %v758 = vsel %vm756, %v752, 0
      %v761 = vsel %vm756, %v755, 0
      %763 = vmatprep.subr.bf16.mxu0 0
      %764 = vmatpush1.bf16.xpose.msra.mxu0 %v761
      %765 = vmatprep.subr.bf16.mxu0 0
      %766 = vmatpush1.bf16.xpose.msra.mxu0 0
      %767 = vmatprep.subr.bf16.mxu0 0
      %768 = vmatpush1.bf16.xpose.msra.mxu0 0
      %769 = vmatprep.subr.bf16.mxu0 0
      %770 = vmatpush1.bf16.xpose.msra.mxu0 0
      %771 = vmatprep.subr.bf16.mxu0 0
      %772 = vmatpush1.bf16.xpose.msra.mxu0 0
      %773 = vmatprep.subr.bf16.mxu0 0
      %774 = vmatpush1.bf16.xpose.msra.mxu0 0
      %775 = vmatprep.subr.bf16.mxu0 0
      %776 = vmatpush1.bf16.xpose.msra.mxu0 0
      %777 = vmatprep.subr.bf16.mxu0 0
      %778 = vmatpush1.bf16.xpose.msra.mxu0 0
      %779 = vmatprep.subr.bf16.mxu0 0
      %780 = vmatpush1.bf16.xpose.msra.mxu0 0
      %781 = vmatprep.subr.bf16.mxu0 0
      %782 = vmatpush1.bf16.xpose.msra.mxu0 0
      %783 = vmatprep.subr.bf16.mxu0 0
      %784 = vmatpush1.bf16.xpose.msra.mxu0 0
      %785 = vmatprep.subr.bf16.mxu0 0
      %786 = vmatpush1.bf16.xpose.msra.mxu0 0
      %787 = vmatprep.subr.bf16.mxu0 0
      %788 = vmatpush1.bf16.xpose.msra.mxu0 0
      %789 = vmatprep.subr.bf16.mxu0 0
      %790 = vmatpush1.bf16.xpose.msra.mxu0 0
      %791 = vmatprep.subr.bf16.mxu0 0
      %792 = vmatpush1.bf16.xpose.msra.mxu0 0
      %793 = vmatprep.subr.bf16.mxu0 0
      %794 = vmatpush1.bf16.xpose.msra.mxu0 0
      %795 = vmatprep.mubr.bf16.mxu0 0
      %796 = vmatmul.mubr.bf16.gmra.mrb[0].mxu0 %v758
      %v797 = vpop.f32.mrb[0].mxu0
      %v798 = vadd.f32 0.0, %v797
      %v799 = vpop.f32.mrb[0].mxu0
      %v800 = vpop.f32.mrb[0].mxu0
      %v801 = vpop.f32.mrb[0].mxu0
      %802 = vdwg.mxu0
      %v803 = vmul.f32 %v798, 0.35355338
      %v804 = vsel %vm751, %v803, -1e+30
      %v805 = vsel %vm756, %v804, -inf
      %806 = vmax.xlane.f32.xlu0 %v805
      %v807 = vpop.xlane.xlu0 %806
      %v808 = vsub.f32 %v804, %v807
      %v809 = vmul.f32 %v808, 1.442695
      %v810 = vpow.pop %v809
      %v811 = vsel %vm756, %v810, 0.0
      %812 = vadd.xlane.f32.xlu0 %v811
      %v813 = vpop.xlane.xlu0 %812
      %v814 = vrcp.pop %v813
      %v815 = vmul.f32 %v810, %v814
      %v816 = vpack.c.bf16 %v815, %v815
      %817 = vrot.lane.b32.xlu0 %v752, 64
      %v818 = vpop.permute.xlu0 %817
      %v820 = vsel %vm756, %v816, 0
      %vm822 = vcmask 1043456
      %v824 = vsel %vm822, %v818, 0
      %826 = vmatprep.subr.bf16.mxu0 0
      %827 = vmatpush1.bf16.msra.mxu0 %v824
      %828 = vmatprep.subr.bf16.mxu0 0
      %829 = vmatpush1.bf16.msra.mxu0 0
      %830 = vmatprep.subr.bf16.mxu0 0
      %831 = vmatpush1.bf16.msra.mxu0 0
      %832 = vmatprep.subr.bf16.mxu0 0
      %833 = vmatpush1.bf16.msra.mxu0 0
      %834 = vmatprep.subr.bf16.mxu0 0
      %835 = vmatpush1.bf16.msra.mxu0 0
      %836 = vmatprep.subr.bf16.mxu0 0
      %837 = vmatpush1.bf16.msra.mxu0 0
      %838 = vmatprep.subr.bf16.mxu0 0
      %839 = vmatpush1.bf16.msra.mxu0 0
      %840 = vmatprep.subr.bf16.mxu0 0
      %841 = vmatpush1.bf16.msra.mxu0 0
      %842 = vmatprep.subr.bf16.mxu0 0
      %843 = vmatpush1.bf16.msra.mxu0 0
      %844 = vmatprep.subr.bf16.mxu0 0
      %845 = vmatpush1.bf16.msra.mxu0 0
      %846 = vmatprep.subr.bf16.mxu0 0
      %847 = vmatpush1.bf16.msra.mxu0 0
      %848 = vmatprep.subr.bf16.mxu0 0
      %849 = vmatpush1.bf16.msra.mxu0 0
      %850 = vmatprep.subr.bf16.mxu0 0
      %851 = vmatpush1.bf16.msra.mxu0 0
      %852 = vmatprep.subr.bf16.mxu0 0
      %853 = vmatpush1.bf16.msra.mxu0 0
      %854 = vmatprep.subr.bf16.mxu0 0
      %855 = vmatpush1.bf16.msra.mxu0 0
      %856 = vmatprep.subr.bf16.mxu0 0
      %857 = vmatpush1.bf16.msra.mxu0 0
      %858 = vmatprep.mubr.bf16.mxu0 0
      %859 = vmatmul.mubr.bf16.gmra.mrb[0].mxu0 %v820
      %v860 = vpop.f32.mrb[0].mxu0
      %v861 = vadd.f32 0.0, %v860
      %v862 = vpop.f32.mrb[0].mxu0
      %v863 = vpop.f32.mrb[0].mxu0
      %v864 = vpop.f32.mrb[0].mxu0
      %865 = vdwg.mxu0
      %866 = vrot.lane.b32.xlu0 %v752, 120
      %v867 = vpop.permute.xlu0 %866
      %868 = vrot.lane.b32.xlu0 %v752, 88
      %v869 = vpop.permute.xlu0 %868
      %v871 = vsel %vm756, %v867, 0
      %v874 = vsel %vm756, %v869, 0
      %876 = vmatprep.subr.bf16.mxu0 0
      %877 = vmatpush1.bf16.xpose.msra.mxu0 %v874
      %878 = vmatprep.subr.bf16.mxu0 0
      %879 = vmatpush1.bf16.xpose.msra.mxu0 0
      %880 = vmatprep.subr.bf16.mxu0 0
      %881 = vmatpush1.bf16.xpose.msra.mxu0 0
      %882 = vmatprep.subr.bf16.mxu0 0
      %883 = vmatpush1.bf16.xpose.msra.mxu0 0
      %884 = vmatprep.subr.bf16.mxu0 0
      %885 = vmatpush1.bf16.xpose.msra.mxu0 0
      %886 = vmatprep.subr.bf16.mxu0 0
      %887 = vmatpush1.bf16.xpose.msra.mxu0 0
      %888 = vmatprep.subr.bf16.mxu0 0
      %889 = vmatpush1.bf16.xpose.msra.mxu0 0
      %890 = vmatprep.subr.bf16.mxu0 0
      %891 = vmatpush1.bf16.xpose.msra.mxu0 0
      %892 = vmatprep.subr.bf16.mxu0 0
      %893 = vmatpush1.bf16.xpose.msra.mxu0 0
      %894 = vmatprep.subr.bf16.mxu0 0
      %895 = vmatpush1.bf16.xpose.msra.mxu0 0
      %896 = vmatprep.subr.bf16.mxu0 0
      %897 = vmatpush1.bf16.xpose.msra.mxu0 0
      %898 = vmatprep.subr.bf16.mxu0 0
      %899 = vmatpush1.bf16.xpose.msra.mxu0 0
      %900 = vmatprep.subr.bf16.mxu0 0
      %901 = vmatpush1.bf16.xpose.msra.mxu0 0
      %902 = vmatprep.subr.bf16.mxu0 0
      %903 = vmatpush1.bf16.xpose.msra.mxu0 0
      %904 = vmatprep.subr.bf16.mxu0 0
      %905 = vmatpush1.bf16.xpose.msra.mxu0 0
      %906 = vmatprep.subr.bf16.mxu0 0
      %907 = vmatpush1.bf16.xpose.msra.mxu0 0
      %908 = vmatprep.mubr.bf16.mxu0 0
      %909 = vmatmul.mubr.bf16.gmra.mrb[0].mxu0 %v871
      %v910 = vpop.f32.mrb[0].mxu0
      %v911 = vadd.f32 0.0, %v910
      %v912 = vpop.f32.mrb[0].mxu0
      %v913 = vpop.f32.mrb[0].mxu0
      %v914 = vpop.f32.mrb[0].mxu0
      %915 = vdwg.mxu0
      %v916 = vmul.f32 %v911, 0.35355338
      %v917 = vsel %vm751, %v916, -1e+30
      %v918 = vsel %vm756, %v917, -inf
      %919 = vmax.xlane.f32.xlu0 %v918
      %v920 = vpop.xlane.xlu0 %919
      %v921 = vsub.f32 %v917, %v920
      %v922 = vmul.f32 %v921, 1.442695
      %v923 = vpow.pop %v922
      %v924 = vsel %vm756, %v923, 0.0
      %925 = vadd.xlane.f32.xlu0 %v924
      %v926 = vpop.xlane.xlu0 %925
      %v927 = vrcp.pop %v926
      %v928 = vmul.f32 %v923, %v927
      %v929 = vpack.c.bf16 %v928, %v928
      %930 = vrot.lane.b32.xlu0 %v752, 56
      %v931 = vpop.permute.xlu0 %930
      %v933 = vsel %vm756, %v929, 0
      %v936 = vsel %vm822, %v931, 0
      %938 = vmatprep.subr.bf16.mxu0 0
      %939 = vmatpush1.bf16.msra.mxu0 %v936
      %940 = vmatprep.subr.bf16.mxu0 0
      %941 = vmatpush1.bf16.msra.mxu0 0
      %942 = vmatprep.subr.bf16.mxu0 0
      %943 = vmatpush1.bf16.msra.mxu0 0
      %944 = vmatprep.subr.bf16.mxu0 0
      %945 = vmatpush1.bf16.msra.mxu0 0
      %946 = vmatprep.subr.bf16.mxu0 0
      %947 = vmatpush1.bf16.msra.mxu0 0
      %948 = vmatprep.subr.bf16.mxu0 0
      %949 = vmatpush1.bf16.msra.mxu0 0
      %950 = vmatprep.subr.bf16.mxu0 0
      %951 = vmatpush1.bf16.msra.mxu0 0
      %952 = vmatprep.subr.bf16.mxu0 0
      %953 = vmatpush1.bf16.msra.mxu0 0
      %954 = vmatprep.subr.bf16.mxu0 0
      %955 = vmatpush1.bf16.msra.mxu0 0
      %956 = vmatprep.subr.bf16.mxu0 0
      %957 = vmatpush1.bf16.msra.mxu0 0
      %958 = vmatprep.subr.bf16.mxu0 0
      %959 = vmatpush1.bf16.msra.mxu0 0
      %960 = vmatprep.subr.bf16.mxu0 0
      %961 = vmatpush1.bf16.msra.mxu0 0
      %962 = vmatprep.subr.bf16.mxu0 0
      %963 = vmatpush1.bf16.msra.mxu0 0
      %964 = vmatprep.subr.bf16.mxu0 0
      %965 = vmatpush1.bf16.msra.mxu0 0
      %966 = vmatprep.subr.bf16.mxu0 0
      %967 = vmatpush1.bf16.msra.mxu0 0
      %968 = vmatprep.subr.bf16.mxu0 0
      %969 = vmatpush1.bf16.msra.mxu0 0
      %970 = vmatprep.mubr.bf16.mxu0 0
      %971 = vmatmul.mubr.bf16.gmra.mrb[0].mxu0 %v933
      %v972 = vpop.f32.mrb[0].mxu0
      %v973 = vadd.f32 0.0, %v972
      %v974 = vpop.f32.mrb[0].mxu0
      %v975 = vpop.f32.mrb[0].mxu0
      %v976 = vpop.f32.mrb[0].mxu0
      %977 = vdwg.mxu0
      %978 = vrot.lane.b32.xlu0 %v752, 112
      %v979 = vpop.permute.xlu0 %978
      %980 = vrot.lane.b32.xlu0 %v752, 80
      %v981 = vpop.permute.xlu0 %980
      %v983 = vsel %vm756, %v979, 0
      %v986 = vsel %vm756, %v981, 0
      %988 = vmatprep.subr.bf16.mxu0 0
      %989 = vmatpush1.bf16.xpose.msra.mxu0 %v986
      %990 = vmatprep.subr.bf16.mxu0 0
      %991 = vmatpush1.bf16.xpose.msra.mxu0 0
      %992 = vmatprep.subr.bf16.mxu0 0
      %993 = vmatpush1.bf16.xpose.msra.mxu0 0
      %994 = vmatprep.subr.bf16.mxu0 0
      %995 = vmatpush1.bf16.xpose.msra.mxu0 0
      %996 = vmatprep.subr.bf16.mxu0 0
      %997 = vmatpush1.bf16.xpose.msra.mxu0 0
      %998 = vmatprep.subr.bf16.mxu0 0
      %999 = vmatpush1.bf16.xpose.msra.mxu0 0
      %1000 = vmatprep.subr.bf16.mxu0 0
      %1001 = vmatpush1.bf16.xpose.msra.mxu0 0
      %1002 = vmatprep.subr.bf16.mxu0 0
      %1003 = vmatpush1.bf16.xpose.msra.mxu0 0
      %1004 = vmatprep.subr.bf16.mxu0 0
      %1005 = vmatpush1.bf16.xpose.msra.mxu0 0
      %1006 = vmatprep.subr.bf16.mxu0 0
      %1007 = vmatpush1.bf16.xpose.msra.mxu0 0
      %1008 = vmatprep.subr.bf16.mxu0 0
      %1009 = vmatpush1.bf16.xpose.msra.mxu0 0
      %1010 = vmatprep.subr.bf16.mxu0 0
      %1011 = vmatpush1.bf16.xpose.msra.mxu0 0
      %1012 = vmatprep.subr.bf16.mxu0 0
      %1013 = vmatpush1.bf16.xpose.msra.mxu0 0
      %1014 = vmatprep.subr.bf16.mxu0 0
      %1015 = vmatpush1.bf16.xpose.msra.mxu0 0
      %1016 = vmatprep.subr.bf16.mxu0 0
      %1017 = vmatpush1.bf16.xpose.msra.mxu0 0
      %1018 = vmatprep.subr.bf16.mxu0 0
      %1019 = vmatpush1.bf16.xpose.msra.mxu0 0
      %1020 = vmatprep.mubr.bf16.mxu0 0
      %1021 = vmatmul.mubr.bf16.gmra.mrb[0].mxu0 %v983
      %v1022 = vpop.f32.mrb[0].mxu0
      %v1023 = vadd.f32 0.0, %v1022
      %v1024 = vpop.f32.mrb[0].mxu0
      %v1025 = vpop.f32.mrb[0].mxu0
      %v1026 = vpop.f32.mrb[0].mxu0
      %1027 = vdwg.mxu0
      %v1028 = vmul.f32 %v1023, 0.35355338
      %v1029 = vsel %vm751, %v1028, -1e+30
      %v1030 = vsel %vm756, %v1029, -inf
      %1031 = vmax.xlane.f32.xlu0 %v1030
      %v1032 = vpop.xlane.xlu0 %1031
      %v1033 = vsub.f32 %v1029, %v1032
      %v1034 = vmul.f32 %v1033, 1.442695
      %v1035 = vpow.pop %v1034
      %v1036 = vsel %vm756, %v1035, 0.0
      %1037 = vadd.xlane.f32.xlu0 %v1036
      %v1038 = vpop.xlane.xlu0 %1037
      %v1039 = vrcp.pop %v1038
      %v1040 = vmul.f32 %v1035, %v1039
      %v1041 = vpack.c.bf16 %v1040, %v1040
      %1042 = vrot.lane.b32.xlu0 %v752, 48
      %v1043 = vpop.permute.xlu0 %1042
      %v1045 = vsel %vm756, %v1041, 0
      %v1048 = vsel %vm822, %v1043, 0
      %1050 = vmatprep.subr.bf16.mxu0 0
      %1051 = vmatpush1.bf16.msra.mxu0 %v1048
      %1052 = vmatprep.subr.bf16.mxu0 0
      %1053 = vmatpush1.bf16.msra.mxu0 0
      %1054 = vmatprep.subr.bf16.mxu0 0
      %1055 = vmatpush1.bf16.msra.mxu0 0
      %1056 = vmatprep.subr.bf16.mxu0 0
      %1057 = vmatpush1.bf16.msra.mxu0 0
      %1058 = vmatprep.subr.bf16.mxu0 0
      %1059 = vmatpush1.bf16.msra.mxu0 0
      %1060 = vmatprep.subr.bf16.mxu0 0
      %1061 = vmatpush1.bf16.msra.mxu0 0
      %1062 = vmatprep.subr.bf16.mxu0 0
      %1063 = vmatpush1.bf16.msra.mxu0 0
      %1064 = vmatprep.subr.bf16.mxu0 0
      %1065 = vmatpush1.bf16.msra.mxu0 0
      %1066 = vmatprep.subr.bf16.mxu0 0
      %1067 = vmatpush1.bf16.msra.mxu0 0
      %1068 = vmatprep.subr.bf16.mxu0 0
      %1069 = vmatpush1.bf16.msra.mxu0 0
      %1070 = vmatprep.subr.bf16.mxu0 0
      %1071 = vmatpush1.bf16.msra.mxu0 0
      %1072 = vmatprep.subr.bf16.mxu0 0
      %1073 = vmatpush1.bf16.msra.mxu0 0
      %1074 = vmatprep.subr.bf16.mxu0 0
      %1075 = vmatpush1.bf16.msra.mxu0 0
      %1076 = vmatprep.subr.bf16.mxu0 0
      %1077 = vmatpush1.bf16.msra.mxu0 0
      %1078 = vmatprep.subr.bf16.mxu0 0
      %1079 = vmatpush1.bf16.msra.mxu0 0
      %1080 = vmatprep.subr.bf16.mxu0 0
      %1081 = vmatpush1.bf16.msra.mxu0 0
      %1082 = vmatprep.mubr.bf16.mxu0 0
      %1083 = vmatmul.mubr.bf16.gmra.mrb[0].mxu0 %v1045
      %v1084 = vpop.f32.mrb[0].mxu0
      %v1085 = vadd.f32 0.0, %v1084
      %v1086 = vpop.f32.mrb[0].mxu0
      %v1087 = vpop.f32.mrb[0].mxu0
      %v1088 = vpop.f32.mrb[0].mxu0
      %1089 = vdwg.mxu0
      %1090 = vrot.lane.b32.xlu0 %v752, 104
      %v1091 = vpop.permute.xlu0 %1090
      %1092 = vrot.lane.b32.xlu0 %v752, 72
      %v1093 = vpop.permute.xlu0 %1092
      %v1095 = vsel %vm756, %v1091, 0
      %v1098 = vsel %vm756, %v1093, 0
      %1100 = vmatprep.subr.bf16.mxu0 0
      %1101 = vmatpush1.bf16.xpose.msra.mxu0 %v1098
      %1102 = vmatprep.subr.bf16.mxu0 0
      %1103 = vmatpush1.bf16.xpose.msra.mxu0 0
      %1104 = vmatprep.subr.bf16.mxu0 0
      %1105 = vmatpush1.bf16.xpose.msra.mxu0 0
      %1106 = vmatprep.subr.bf16.mxu0 0
      %1107 = vmatpush1.bf16.xpose.msra.mxu0 0
      %1108 = vmatprep.subr.bf16.mxu0 0
      %1109 = vmatpush1.bf16.xpose.msra.mxu0 0
      %1110 = vmatprep.subr.bf16.mxu0 0
      %1111 = vmatpush1.bf16.xpose.msra.mxu0 0
      %1112 = vmatprep.subr.bf16.mxu0 0
      %1113 = vmatpush1.bf16.xpose.msra.mxu0 0
      %1114 = vmatprep.subr.bf16.mxu0 0
      %1115 = vmatpush1.bf16.xpose.msra.mxu0 0
      %1116 = vmatprep.subr.bf16.mxu0 0
      %1117 = vmatpush1.bf16.xpose.msra.mxu0 0
      %1118 = vmatprep.subr.bf16.mxu0 0
      %1119 = vmatpush1.bf16.xpose.msra.mxu0 0
      %1120 = vmatprep.subr.bf16.mxu0 0
      %1121 = vmatpush1.bf16.xpose.msra.mxu0 0
      %1122 = vmatprep.subr.bf16.mxu0 0
      %1123 = vmatpush1.bf16.xpose.msra.mxu0 0
      %1124 = vmatprep.subr.bf16.mxu0 0
      %1125 = vmatpush1.bf16.xpose.msra.mxu0 0
      %1126 = vmatprep.subr.bf16.mxu0 0
      %1127 = vmatpush1.bf16.xpose.msra.mxu0 0
      %1128 = vmatprep.subr.bf16.mxu0 0
      %1129 = vmatpush1.bf16.xpose.msra.mxu0 0
      %1130 = vmatprep.subr.bf16.mxu0 0
      %1131 = vmatpush1.bf16.xpose.msra.mxu0 0
      %1132 = vmatprep.mubr.bf16.mxu0 0
      %1133 = vmatmul.mubr.bf16.gmra.mrb[0].mxu0 %v1095
      %v1134 = vpop.f32.mrb[0].mxu0
      %v1135 = vadd.f32 0.0, %v1134
      %v1136 = vpop.f32.mrb[0].mxu0
      %v1137 = vpop.f32.mrb[0].mxu0
      %v1138 = vpop.f32.mrb[0].mxu0
      %1139 = vdwg.mxu0
      %v1140 = vmul.f32 %v1135, 0.35355338
      %v1141 = vsel %vm751, %v1140, -1e+30
      %v1142 = vsel %vm756, %v1141, -inf
      %1143 = vmax.xlane.f32.xlu0 %v1142
      %v1144 = vpop.xlane.xlu0 %1143
      %v1145 = vsub.f32 %v1141, %v1144
      %v1146 = vmul.f32 %v1145, 1.442695
      %v1147 = vpow.pop %v1146
      %v1148 = vsel %vm756, %v1147, 0.0
      %1149 = vadd.xlane.f32.xlu0 %v1148
      %v1150 = vpop.xlane.xlu0 %1149
      %v1151 = vrcp.pop %v1150
      %v1152 = vmul.f32 %v1147, %v1151
      %v1153 = vpack.c.bf16 %v1152, %v1152
      %1154 = vrot.lane.b32.xlu0 %v752, 40
      %v1155 = vpop.permute.xlu0 %1154
      %v1157 = vsel %vm756, %v1153, 0
      %v1160 = vsel %vm822, %v1155, 0
      %1162 = vmatprep.subr.bf16.mxu0 0
      %1163 = vmatpush1.bf16.msra.mxu0 %v1160
      %1164 = vmatprep.subr.bf16.mxu0 0
      %1165 = vmatpush1.bf16.msra.mxu0 0
      %1166 = vmatprep.subr.bf16.mxu0 0
      %1167 = vmatpush1.bf16.msra.mxu0 0
      %1168 = vmatprep.subr.bf16.mxu0 0
      %1169 = vmatpush1.bf16.msra.mxu0 0
      %1170 = vmatprep.subr.bf16.mxu0 0
      %1171 = vmatpush1.bf16.msra.mxu0 0
      %1172 = vmatprep.subr.bf16.mxu0 0
      %1173 = vmatpush1.bf16.msra.mxu0 0
      %1174 = vmatprep.subr.bf16.mxu0 0
      %1175 = vmatpush1.bf16.msra.mxu0 0
      %1176 = vmatprep.subr.bf16.mxu0 0
      %1177 = vmatpush1.bf16.msra.mxu0 0
      %1178 = vmatprep.subr.bf16.mxu0 0
      %1179 = vmatpush1.bf16.msra.mxu0 0
      %1180 = vmatprep.subr.bf16.mxu0 0
      %1181 = vmatpush1.bf16.msra.mxu0 0
      %1182 = vmatprep.subr.bf16.mxu0 0
      %1183 = vmatpush1.bf16.msra.mxu0 0
      %1184 = vmatprep.subr.bf16.mxu0 0
      %1185 = vmatpush1.bf16.msra.mxu0 0
      %1186 = vmatprep.subr.bf16.mxu0 0
      %1187 = vmatpush1.bf16.msra.mxu0 0
      %1188 = vmatprep.subr.bf16.mxu0 0
      %1189 = vmatpush1.bf16.msra.mxu0 0
      %1190 = vmatprep.subr.bf16.mxu0 0
      %1191 = vmatpush1.bf16.msra.mxu0 0
      %1192 = vmatprep.subr.bf16.mxu0 0
      %1193 = vmatpush1.bf16.msra.mxu0 0
      %1194 = vmatprep.mubr.bf16.mxu0 0
      %1195 = vmatmul.mubr.bf16.gmra.mrb[0].mxu0 %v1157
      %v1196 = vpop.f32.mrb[0].mxu0
      %v1197 = vadd.f32 0.0, %v1196
      %v1198 = vpop.f32.mrb[0].mxu0
      %v1199 = vpop.f32.mrb[0].mxu0
      %v1200 = vpop.f32.mrb[0].mxu0
      %1201 = vdwg.mxu0
      %1203 = vrot.lane.b32.xlu0 %v973, 8
      %v1204 = vpop.permute.xlu0 %1203
      %1207 = vrot.lane.b32.xlu0 %v1085, 16
      %v1208 = vpop.permute.xlu0 %1207
      %1211 = vrot.lane.b32.xlu0 %v1197, 24
      %v1212 = vpop.permute.xlu0 %1211
      %v1214 = vsel %vm756, %v861, %v1204
      %vm1215 = vcmask 130048
      %v1216 = vsel %vm1215, %v1214, %v1208
      %vm1217 = vcmask 195584
      %v1218 = vsel %vm1217, %v1216, %v1212
      %v1219 = vpack.c.bf16 %v1218, %v1218
      %v1220 = vld [vmem:[%s610] sm:$0xf]
      %v1221 = vld [vmem:[%s610 + $0x4] sm:$0xf]
      %v1222 = vld [vmem:[%s610 + $0x8] sm:$0xf]
      %v1223 = vld [vmem:[%s610 + $0xc] sm:$0xf]
      %v1228 = vunpack.c.l.b16 %v1220
      %v1229 = vunpack.c.l.b16 %v1221
      %v1230 = vunpack.c.l.b16 %v1222
      %v1231 = vunpack.c.l.b16 %v1223
      %v1232 = vpack.c.b16 %v1229, %v1228
      %v1233 = vpack.c.b16 %v1231, %v1230
      %v1237 = vsel %vm651, %v1219, 0
      %1239 = vmatprep.subr.bf16.mxu0 0
      %1240 = vmatpush1.bf16.msra.mxu0 %v1232
      %1241 = vmatprep.subr.bf16.mxu0 0
      %1242 = vmatpush1.bf16.msra.mxu0 %v1233
      %1243 = vmatprep.subr.bf16.mxu0 0
      %1244 = vmatpush1.bf16.msra.mxu0 0
      %1245 = vmatprep.subr.bf16.mxu0 0
      %1246 = vmatpush1.bf16.msra.mxu0 0
      %1247 = vmatprep.subr.bf16.mxu0 0
      %1248 = vmatpush1.bf16.msra.mxu0 0
      %1249 = vmatprep.subr.bf16.mxu0 0
      %1250 = vmatpush1.bf16.msra.mxu0 0
      %1251 = vmatprep.subr.bf16.mxu0 0
      %1252 = vmatpush1.bf16.msra.mxu0 0
      %1253 = vmatprep.subr.bf16.mxu0 0
      %1254 = vmatpush1.bf16.msra.mxu0 0
      %1255 = vmatprep.subr.bf16.mxu0 0
      %1256 = vmatpush1.bf16.msra.mxu0 0
      %1257 = vmatprep.subr.bf16.mxu0 0
      %1258 = vmatpush1.bf16.msra.mxu0 0
      %1259 = vmatprep.subr.bf16.mxu0 0
      %1260 = vmatpush1.bf16.msra.mxu0 0
      %1261 = vmatprep.subr.bf16.mxu0 0
      %1262 = vmatpush1.bf16.msra.mxu0 0
      %1263 = vmatprep.subr.bf16.mxu0 0
      %1264 = vmatpush1.bf16.msra.mxu0 0
      %1265 = vmatprep.subr.bf16.mxu0 0
      %1266 = vmatpush1.bf16.msra.mxu0 0
      %1267 = vmatprep.subr.bf16.mxu0 0
      %1268 = vmatpush1.bf16.msra.mxu0 0
      %1269 = vmatprep.subr.bf16.mxu0 0
      %1270 = vmatpush1.bf16.msra.mxu0 0
      %1271 = vmatprep.mubr.bf16.mxu0 0
      %1272 = vmatmul.mubr.bf16.gmra.mrb[0].mxu0 %v1237
      %v1273 = vpop.f32.mrb[0].mxu0
      %v1274 = vadd.f32 0.0, %v1273
      %v1275 = vpop.f32.mrb[0].mxu0
      %v1276 = vpop.f32.mrb[0].mxu0
      %v1277 = vpop.f32.mrb[0].mxu0
      %1278 = vdwg.mxu0
      %v1279 = vadd.f32 %v648, %v1274
      %v1280 = vld [vmem:[%s613] sm:$0x1]
      %v1282 = vlaneseq
      %v1283 = vshrl.u32 %v1282, 7
      %v1284 = vsub.s32 0, %v1283
      %v1285 = vrot.slane %v1280, %v1284
      %v1287 = vadd.f32 %v1279, %v1285
      %v1288 = vld [vmem:[%s616] sm:$0x1]
      %v1289 = vld [vmem:[%s619] sm:$0x1]
      %v1290 = vsel %vm651, %v1287, 0.0
      %1291 = vadd.xlane.f32.xlu0 %v1290
      %v1292 = vpop.xlane.xlu0 %1291
      %v1293 = vmul.f32 %v1292, %v655
      %v1294 = vsub.f32 %v1287, %v1293
      %v1295 = vmul.f32 %v1294, %v1294
      %v1296 = vsel %vm651, %v1295, 0.0
      %1297 = vadd.xlane.f32.xlu0 %v1296
      %v1298 = vpop.xlane.xlu0 %1297
      %v1299 = vmul.f32 %v1298, %v655
      %v1300 = vadd.f32 %v1299, 1e-05
      %v1301 = vrsqrt.pop %v1300
      %v1302 = vmul.f32 %v1294, %v1301
      %v1304 = vlaneseq
      %v1305 = vshrl.u32 %v1304, 7
      %v1306 = vsub.s32 0, %v1305
      %v1307 = vrot.slane %v1288, %v1306
      %v1309 = vmul.f32 %v1302, %v1307
      %v1311 = vlaneseq
      %v1312 = vshrl.u32 %v1311, 7
      %v1313 = vsub.s32 0, %v1312
      %v1314 = vrot.slane %v1289, %v1313
      %v1316 = vadd.f32 %v1309, %v1314
      %v1317 = vpack.c.bf16 %v1316, %v1316
      %v1318 = vld [vmem:[%s624] sm:$0xf]
      %v1319 = vld [vmem:[%s624 + $0x4] sm:$0xf]
      %v1320 = vld [vmem:[%s624 + $0x8] sm:$0xf]
      %v1321 = vld [vmem:[%s624 + $0xc] sm:$0xf]
      %v1322 = vld [vmem:[%s627] sm:$0x1]
      %v1324 = vlaneseq
      %v1325 = vshrl.u32 %v1324, 7
      %v1326 = vsub.s32 0, %v1325
      %v1327 = vrot.slane %v1322, %v1326
      %v1333 = vunpack.c.l.b16 %v1318
      %v1334 = vunpack.c.l.b16 %v1319
      %v1335 = vunpack.c.l.b16 %v1320
      %v1336 = vunpack.c.l.b16 %v1321
      %v1337 = vpack.c.b16 %v1334, %v1333
      %v1338 = vpack.c.b16 %v1336, %v1335
      %v1342 = vsel %vm651, %v1317, 0
      %1344 = vmatprep.subr.bf16.mxu0 0
      %1345 = vmatpush1.bf16.msra.mxu0 %v1337
      %1346 = vmatprep.subr.bf16.mxu0 0
      %1347 = vmatpush1.bf16.msra.mxu0 %v1338
      %1348 = vmatprep.subr.bf16.mxu0 0
      %1349 = vmatpush1.bf16.msra.mxu0 0
      %1350 = vmatprep.subr.bf16.mxu0 0
      %1351 = vmatpush1.bf16.msra.mxu0 0
      %1352 = vmatprep.subr.bf16.mxu0 0
      %1353 = vmatpush1.bf16.msra.mxu0 0
      %1354 = vmatprep.subr.bf16.mxu0 0
      %1355 = vmatpush1.bf16.msra.mxu0 0
      %1356 = vmatprep.subr.bf16.mxu0 0
      %1357 = vmatpush1.bf16.msra.mxu0 0
      %1358 = vmatprep.subr.bf16.mxu0 0
      %1359 = vmatpush1.bf16.msra.mxu0 0
      %1360 = vmatprep.subr.bf16.mxu0 0
      %1361 = vmatpush1.bf16.msra.mxu0 0
      %1362 = vmatprep.subr.bf16.mxu0 0
      %1363 = vmatpush1.bf16.msra.mxu0 0
      %1364 = vmatprep.subr.bf16.mxu0 0
      %1365 = vmatpush1.bf16.msra.mxu0 0
      %1366 = vmatprep.subr.bf16.mxu0 0
      %1367 = vmatpush1.bf16.msra.mxu0 0
      %1368 = vmatprep.subr.bf16.mxu0 0
      %1369 = vmatpush1.bf16.msra.mxu0 0
      %1370 = vmatprep.subr.bf16.mxu0 0
      %1371 = vmatpush1.bf16.msra.mxu0 0
      %1372 = vmatprep.subr.bf16.mxu0 0
      %1373 = vmatpush1.bf16.msra.mxu0 0
      %1374 = vmatprep.subr.bf16.mxu0 0
      %1375 = vmatpush1.bf16.msra.mxu0 0
      %1376 = vmatprep.mubr.bf16.mxu0 0
      %1377 = vmatmul.mubr.bf16.gmra.mrb[0].mxu0 %v1342
      %v1378 = vpop.f32.mrb[0].mxu0
      %v1379 = vadd.f32 %v1327, %v1378
      %v1380 = vpop.f32.mrb[0].mxu0
      %v1381 = vpop.f32.mrb[0].mxu0
      %v1382 = vpop.f32.mrb[0].mxu0
      %1383 = vdwg.mxu0
      %v1384 = vmul.f32 %v1379, 0.5
      %v1385 = vmul.f32 %v1379, 0.044715
      %v1386 = vmul.f32 %v1385, %v1379
      %v1387 = vmul.f32 %v1386, %v1379
      %v1388 = vadd.f32 %v1379, %v1387
      %v1389 = vmul.f32 %v1388, 0.7978846
      %v1390 = vtanh.pop %v1389
      %v1391 = vadd.f32 %v1390, 1.0
      %v1392 = vmul.f32 %v1384, %v1391
      %v1393 = vpack.c.bf16 %v1392, %v1392
      %v1394 = vld [vmem:[%s632] sm:$0xf]
      %v1395 = vld [vmem:[%s632 + $0x4] sm:$0xf]
      %v1396 = vld [vmem:[%s632 + $0x8] sm:$0xf]
      %v1397 = vld [vmem:[%s632 + $0xc] sm:$0xf]
      %v1398 = vld [vmem:[%s632 + $0x10] sm:$0xf]
      %v1399 = vld [vmem:[%s632 + $0x14] sm:$0xf]
      %v1400 = vld [vmem:[%s632 + $0x18] sm:$0xf]
      %v1401 = vld [vmem:[%s632 + $0x1c] sm:$0xf]
      %v1402 = vld [vmem:[%s632 + $0x20] sm:$0xf]
      %v1403 = vld [vmem:[%s632 + $0x24] sm:$0xf]
      %v1404 = vld [vmem:[%s632 + $0x28] sm:$0xf]
      %v1405 = vld [vmem:[%s632 + $0x2c] sm:$0xf]
      %v1406 = vld [vmem:[%s632 + $0x30] sm:$0xf]
      %v1407 = vld [vmem:[%s632 + $0x34] sm:$0xf]
      %v1408 = vld [vmem:[%s632 + $0x38] sm:$0xf]
      %v1409 = vld [vmem:[%s632 + $0x3c] sm:$0xf]
      %v1410 = vld [vmem:[%s635] sm:$0x1]
      %v1412 = vlaneseq
      %v1413 = vshrl.u32 %v1412, 7
      %v1414 = vsub.s32 0, %v1413
      %v1415 = vrot.slane %v1410, %v1414
      %v1433 = vunpack.c.l.b16 %v1394
      %v1434 = vunpack.c.l.b16 %v1395
      %v1435 = vunpack.c.l.b16 %v1396
      %v1436 = vunpack.c.l.b16 %v1397
      %v1437 = vunpack.c.l.b16 %v1398
      %v1438 = vunpack.c.l.b16 %v1399
      %v1439 = vunpack.c.l.b16 %v1400
      %v1440 = vunpack.c.l.b16 %v1401
      %v1441 = vunpack.c.l.b16 %v1402
      %v1442 = vunpack.c.l.b16 %v1403
      %v1443 = vunpack.c.l.b16 %v1404
      %v1444 = vunpack.c.l.b16 %v1405
      %v1445 = vunpack.c.l.b16 %v1406
      %v1446 = vunpack.c.l.b16 %v1407
      %v1447 = vunpack.c.l.b16 %v1408
      %v1448 = vunpack.c.l.b16 %v1409
      %v1449 = vpack.c.b16 %v1434, %v1433
      %v1450 = vpack.c.b16 %v1436, %v1435
      %v1451 = vpack.c.b16 %v1438, %v1437
      %v1452 = vpack.c.b16 %v1440, %v1439
      %v1453 = vpack.c.b16 %v1442, %v1441
      %v1454 = vpack.c.b16 %v1444, %v1443
      %v1455 = vpack.c.b16 %v1446, %v1445
      %v1456 = vpack.c.b16 %v1448, %v1447
      %1465 = vmatprep.subr.bf16.mxu0 0
      %1466 = vmatpush1.bf16.msra.mxu0 %v1449
      %1467 = vmatprep.subr.bf16.mxu0 0
      %1468 = vmatpush1.bf16.msra.mxu0 %v1450
      %1469 = vmatprep.subr.bf16.mxu0 0
      %1470 = vmatpush1.bf16.msra.mxu0 %v1451
      %1471 = vmatprep.subr.bf16.mxu0 0
      %1472 = vmatpush1.bf16.msra.mxu0 %v1452
      %1473 = vmatprep.subr.bf16.mxu0 0
      %1474 = vmatpush1.bf16.msra.mxu0 %v1453
      %1475 = vmatprep.subr.bf16.mxu0 0
      %1476 = vmatpush1.bf16.msra.mxu0 %v1454
      %1477 = vmatprep.subr.bf16.mxu0 0
      %1478 = vmatpush1.bf16.msra.mxu0 %v1455
      %1479 = vmatprep.subr.bf16.mxu0 0
      %1480 = vmatpush1.bf16.msra.mxu0 %v1456
      %1481 = vmatprep.subr.bf16.mxu0 0
      %1482 = vmatpush1.bf16.msra.mxu0 0
      %1483 = vmatprep.subr.bf16.mxu0 0
      %1484 = vmatpush1.bf16.msra.mxu0 0
      %1485 = vmatprep.subr.bf16.mxu0 0
      %1486 = vmatpush1.bf16.msra.mxu0 0
      %1487 = vmatprep.subr.bf16.mxu0 0
      %1488 = vmatpush1.bf16.msra.mxu0 0
      %1489 = vmatprep.subr.bf16.mxu0 0
      %1490 = vmatpush1.bf16.msra.mxu0 0
      %1491 = vmatprep.subr.bf16.mxu0 0
      %1492 = vmatpush1.bf16.msra.mxu0 0
      %1493 = vmatprep.subr.bf16.mxu0 0
      %1494 = vmatpush1.bf16.msra.mxu0 0
      %1495 = vmatprep.subr.bf16.mxu0 0
      %1496 = vmatpush1.bf16.msra.mxu0 0
      %1497 = vmatprep.mubr.bf16.mxu0 0
      %1498 = vmatmul.mubr.bf16.gmra.mrb[0].mxu0 %v1393
      %v1499 = vpop.f32.mrb[0].mxu0
      %v1500 = vadd.f32 %v1415, %v1499
      %v1501 = vpop.f32.mrb[0].mxu0
      %v1502 = vpop.f32.mrb[0].mxu0
      %v1503 = vpop.f32.mrb[0].mxu0
      %1504 = vdwg.mxu0
      %v1505 = vadd.f32 %v1287, %v1500
      %1506 = vst.msk [vmem:[#allocation2] sm:$0xff] %vm651, %v1505
      %p1507 = scmp.eq.s32.totalorder %s29, 1
      // Predicated region
      $region77: #{gpt_forward.4} parent=71 // pred_check
        %p1508 = pneg %p1507
      $region78: #{gpt_forward.4} parent=71 // pred_check_branch
        %1510 = sbr.rel (%p1508) target = $region80
      $region79: #{gpt_forward.4} parent=71 // pred_region
        %v1511 = vld [vmem:[#allocation2] sm:$0xff]
        %1512 = vst.msk [vmem:[%s639] sm:$0xff] %vm651, %v1511
      $region80: #{gpt_forward.4} parent=71 // pred_fallthru
        _
      %p1513 = scmp.lt.s32.totalorder %s28, 1
      %s1514 = scalar_select %p1513, %s28, 1
      %s1515 = smul.addr %s1514, 8
      %s1516 = scalar_lea.vmem %s13, %s1515
      // Predicated region
      $region81: #{gpt_forward.4} parent=71 // pred_check
        %p1517 = pneg %p392
      $region82: #{gpt_forward.4} parent=71 // pred_check_branch
        %1519 = sbr.rel (%p1517) target = $region84
      $region83: #{gpt_forward.4} parent=71 // pred_region
        _
      $region84: #{gpt_forward.4} parent=71 // pred_fallthru
        _
    $region72: #{gpt_forward.4} parent=5 // pred_fallthru
      _
    %p1520 = scmp.le.s32.totalorder 2, %s19
    // Predicated region
    $region85: #{gpt_forward.4} parent=5 // pred_check
      %p1521 = pneg %p1520
    $region86: #{gpt_forward.4} parent=5 // pred_check_branch
      %1523 = sbr.rel (%p1521) target = $region88
    $region87: #{gpt_forward.4} parent=5 // pred_region
      %s1524 = ssub.s32 %s19, 2
      // Predicated region
      $region89: #{gpt_forward.4} parent=87 // pred_check
        %p1525 = pneg %p398
      $region90: #{gpt_forward.4} parent=87 // pred_check_branch
        %1527 = sbr.rel (%p1525) target = $region92
      $region91: #{gpt_forward.4} parent=87 // pred_region
        %p1528 = scmp.lt.s32.totalorder %s30, 1
        %s1529 = scalar_select %p1528, %s30, 1
        %s1530 = smul.addr %s1529, 8
        %s1531 = scalar_lea.vmem %s13, %s1530
      $region92: #{gpt_forward.4} parent=87 // pred_fallthru
        _
    $region88: #{gpt_forward.4} parent=5 // pred_fallthru
      _
  $region6: #{gpt_forward.4} parent=0 // loop_footer
    %s23 = sadd.s32 1, %s19
  $region7: #{gpt_forward.4} parent=0 // loop_footer_branch
    %18 = sbr.rel target = $region3
  $region8: #{gpt_forward.4} parent=0 // loop_exit
    _

</llo_original>
